<compile_context>
chip_gen: v5e
topology: v5e:2x2
jax: 0.10.0
libtpu: 0.0.40
codegen_flags: <defaults>
</compile_context>

<pallas_src>
import functools
import math

import jax
import jax.numpy as jnp
import numpy as np
from jax import lax
from jax.experimental import pallas as pl
from jax.experimental.pallas import tpu as pltpu


def _tree_sum(terms):
    """Balanced-tree sum of a list of arrays (breaks serial add dependency)."""
    terms = list(terms)
    while len(terms) > 1:
        nxt = []
        for i in range(0, len(terms) - 1, 2):
            nxt.append(terms[i] + terms[i + 1])
        if len(terms) % 2:
            nxt.append(terms[-1])
        terms = nxt
    return terms[0]


def _cbam_kernel(x_ref, w1t_ref, b1_ref, w2t_ref, b2_ref, wtab_ref, masks_ref,
                 cb_ref, o_ref, feat_ref, acc_ref, *, H, W, ksize, Bblk, C, chunk):
    """x_ref: (Bblk, C, H*W) f32 block. feat_ref/acc_ref: (2*Bblk, HW) VMEM scratch."""
    HW = H * W
    pad = ksize // 2
    x = x_ref[...]                                        # (Bblk, C, HW)

    # ---------------- Channel attention (MLP routed to the MXU) ----------------
    avg_p = jnp.mean(x, axis=2)                           # (Bblk, C)
    max_p = jnp.max(x, axis=2)                            # (Bblk, C)
    pooled = jnp.concatenate([avg_p, max_p], axis=0)      # (2*Bblk, C)

    h = jnp.dot(pooled, w1t_ref[...],
                preferred_element_type=jnp.float32) + b1_ref[...]   # (2*Bblk, Cr)
    h = jnp.maximum(h, 0.0)                                          # ReLU
    z = jnp.dot(h, w2t_ref[...],
                preferred_element_type=jnp.float32) + b2_ref[...]   # (2*Bblk, C)
    ca = jax.nn.sigmoid(z[:Bblk, :] + z[Bblk:, :])        # (Bblk, C)

    # Channel-refined features, staged through the output block so the
    # multi-MiB intermediate lives in VMEM instead of the vreg file.
    o_ref[...] = x * ca[:, :, None]
    x1 = o_ref[...]                                       # (Bblk, C, HW)

    # ---------------- Spatial attention ----------------
    # Packed [avg; max] channel-pooled maps: rows [0,Bblk) avg, [Bblk,2*Bblk) max.
    feat_ref[0:Bblk, :] = jnp.mean(x1, axis=1)            # (Bblk, HW)
    feat_ref[Bblk:2 * Bblk, :] = jnp.max(x1, axis=1)      # (Bblk, HW)

    # 7x7 zero-padded cross-correlation via separable lane-rolls + mask
    # multiplies, chunked over sublane rows to bound vreg pressure.
    # masks_ref rows [0,k): column masks (applied after the dx roll),
    #           rows [k,2k): row masks (applied after the dy roll).
    for r0 in range(0, 2 * Bblk, chunk):
        f = feat_ref[r0:r0 + chunk, :]                    # (chunk, HW)
        # Stage 1: ksize dx lane-rolls shared across all ky taps.
        shifted = []
        for kx in range(ksize):
            dx = kx - pad
            s = f if dx == 0 else pltpu.roll(f, (-dx) % HW, axis=1)
            shifted.append(s * masks_ref[kx:kx + 1, :])
        # Stage 2: per-ky weighted sum, one dy roll each, row mask after.
        parts = []
        for ky in range(ksize):
            dy = ky - pad
            terms = [shifted[kx] * wtab_ref[r0:r0 + chunk,
                                            ky * ksize + kx:ky * ksize + kx + 1]
                     for kx in range(ksize)]
            s_ky = _tree_sum(terms)
            if dy != 0:
                s_ky = pltpu.roll(s_ky, (-(dy * W)) % HW, axis=1)
            parts.append(s_ky * masks_ref[ksize + ky:ksize + ky + 1, :])
        acc_ref[r0:r0 + chunk, :] = _tree_sum(parts)

    # Sum avg-channel and max-channel contributions per batch, add bias, sigmoid.
    conv = acc_ref[0:Bblk, :] + acc_ref[Bblk:2 * Bblk, :] + cb_ref[0]
    sa = jax.nn.sigmoid(conv)                             # (Bblk, HW)

    # Final output: spatial scale applied to the staged channel-refined features.
    o_ref[...] = o_ref[...] * sa[:, None, :]


def _vmem_limit_bytes():
    """Per-generation scoped-VMEM budget (v7x: ~48 MiB, v5e/v6e: ~96 MiB)."""
    try:
        cap = pltpu.get_tpu_info().vmem_capacity_bytes
    except Exception:  # pragma: no cover - conservative fallback (v7x per-TC)
        cap = 64 * 1024 * 1024
    return int(min(cap * 3 // 4, 100 * 1024 * 1024))


def _choose_bblk(B, C, HW, vmem_limit):
    """Largest batch block that (a) divides B, (b) keeps the block multi-MiB but
    well inside the VMEM budget (in/out double-buffered + temporaries), (c) keeps
    grid >= 2 when B >= 2, and (d) keeps the conv chunking sublane-aligned."""
    bytes_per_b = C * HW * 4
    max_block = max(bytes_per_b, vmem_limit // 10)
    target_block = min(max_block, 6 * 1024 * 1024)
    cap = max(1, min(B, target_block // bytes_per_b))

    def ok(d):
        return B % d == 0 and d <= cap and (d <= 8 or d % 8 == 0)

    cands = [d for d in range(1, B + 1) if ok(d)]
    multi = [d for d in cands if B // d >= 2]
    if multi:
        return max(multi)
    return max(cands) if cands else 1


def cbam_pallas(x, w1, b1, w2, b2, conv_w, conv_b, *, ksize=7):
    """x: (B, C, H, W) float32 (NCHW, as in PyTorch)."""
    B, C, H, W = x.shape
    HW = H * W
    Cr = w1.shape[0]
    k2 = ksize * ksize
    pad = ksize // 2

    vmem_limit = _vmem_limit_bytes()
    Bblk = _choose_bblk(B, C, HW, vmem_limit)
    rows = 2 * Bblk
    chunk = rows if rows <= 16 else 16   # rows % 16 == 0 guaranteed by _choose_bblk

    # TODO(synk): for H*W not a multiple of 128, pad the lane dim (with masked
    # pooling) so output stores stay unmasked; correctness is unaffected as is.

    x3 = x.reshape(B, C, HW).astype(jnp.float32)
    w1t = w1.astype(jnp.float32).T                         # (C, Cr)
    b1r = b1.reshape(1, Cr).astype(jnp.float32)            # (1, Cr)
    w2t = w2.astype(jnp.float32).T                         # (Cr, C)
    b2r = b2.reshape(1, C).astype(jnp.float32)             # (1, C)

    # Conv weight table: rows [0, Bblk) -> avg-channel weights, rows
    # [Bblk, 2*Bblk) -> max-channel weights, matching the packed feat layout.
    wtab = jnp.concatenate(
        [jnp.broadcast_to(conv_w[0, 0].reshape(1, k2), (Bblk, k2)),
         jnp.broadcast_to(conv_w[0, 1].reshape(1, k2), (Bblk, k2))],
        axis=0).astype(jnp.float32)                        # (2*Bblk, k2)
    cb = conv_b.astype(jnp.float32).reshape(1)             # (1,)

    # Boundary masks (zero padding), precomputed ONCE on the host.
    lin = np.arange(HW)
    r_idx, c_idx = lin // W, lin % W
    col_m = np.stack([((c_idx + (kx - pad) >= 0) & (c_idx + (kx - pad) < W))
                      for kx in range(ksize)]).astype(np.float32)
    row_m = np.stack([((r_idx + (ky - pad) >= 0) & (r_idx + (ky - pad) < H))
                      for ky in range(ksize)]).astype(np.float32)
    masks = jnp.asarray(np.concatenate([col_m, row_m], axis=0))  # (2*ksize, HW)

    kernel = functools.partial(_cbam_kernel, H=H, W=W, ksize=ksize,
                               Bblk=Bblk, C=C, chunk=chunk)

    out = pl.pallas_call(
        kernel,
        out_shape=jax.ShapeDtypeStruct((B, C, HW), jnp.float32),
        grid_spec=pltpu.PrefetchScalarGridSpec(
            num_scalar_prefetch=0,
            grid=(B // Bblk,),
            in_specs=[
                pl.BlockSpec((Bblk, C, HW), lambda g: (g, 0, 0)),    # x
                pl.BlockSpec((C, Cr), lambda g: (0, 0)),             # w1^T
                pl.BlockSpec((1, Cr), lambda g: (0, 0)),             # b1
                pl.BlockSpec((Cr, C), lambda g: (0, 0)),             # w2^T
                pl.BlockSpec((1, C), lambda g: (0, 0)),              # b2
                pl.BlockSpec((rows, k2), lambda g: (0, 0)),          # conv weight table
                pl.BlockSpec((2 * ksize, HW), lambda g: (0, 0)),     # boundary masks
                pl.BlockSpec(memory_space=pltpu.MemorySpace.SMEM),   # conv bias
            ],
            out_specs=pl.BlockSpec((Bblk, C, HW), lambda g: (g, 0, 0)),
            scratch_shapes=[
                pltpu.VMEM((rows, HW), jnp.float32),   # packed [avg; max] spatial maps
                pltpu.VMEM((rows, HW), jnp.float32),   # conv accumulator
            ],
        ),
        compiler_params=pltpu.CompilerParams(
            # Batch axis has no cross-iteration dependency -> v7x's two
            # TensorCores can split it (no-op on single-TC v5e/v6e).
            dimension_semantics=("parallel",),
            vmem_limit_bytes=vmem_limit,
        ),
    )(x3, w1t, b1r, w2t, b2r, wtab, masks, cb)

    return out.reshape(B, C, H, W)


def cbam_reference(x, w1, b1, w2, b2, conv_w, conv_b, *, ksize=7):
    """Pure-JAX reference matching the PyTorch CbamBlock forward."""
    pad = ksize // 2
    avg_p = x.mean(axis=(2, 3))                  # (B, C)
    max_p = x.max(axis=(2, 3))                   # (B, C)

    def fc(p):
        return jnp.maximum(p @ w1.T + b1, 0.0) @ w2.T + b2

    ca = jax.nn.sigmoid(fc(avg_p) + fc(max_p))[:, :, None, None]
    x1 = x * ca

    avg_s = x1.mean(axis=1, keepdims=True)
    max_s = x1.max(axis=1, keepdims=True)
    cat = jnp.concatenate([avg_s, max_s], axis=1)
    conv = lax.conv_general_dilated(
        cat, conv_w, window_strides=(1, 1), padding=((pad, pad), (pad, pad)),
        dimension_numbers=("NCHW", "OIHW", "NCHW")) + conv_b.reshape(1, 1, 1, 1)
    sa = jax.nn.sigmoid(conv)
    return x1 * sa


if __name__ == "__main__":
    def run_case(key, B, C, H, W, reduction=16, ksize=7):
        Cr = max(C // reduction, 1)
        kx_, k1, k2_, k3, k4, k5, k6 = jax.random.split(key, 7)

        x = jax.random.normal(kx_, (B, C, H, W), dtype=jnp.float32)

        bnd1 = 1.0 / math.sqrt(C)
        w1 = jax.random.uniform(k1, (Cr, C), jnp.float32, -bnd1, bnd1)
        b1 = jax.random.uniform(k2_, (Cr,), jnp.float32, -bnd1, bnd1)
        bnd2 = 1.0 / math.sqrt(Cr)
        w2 = jax.random.uniform(k3, (C, Cr), jnp.float32, -bnd2, bnd2)
        b2 = jax.random.uniform(k4, (C,), jnp.float32, -bnd2, bnd2)
        bndc = 1.0 / math.sqrt(2 * ksize * ksize)
        conv_w = jax.random.uniform(k5, (1, 2, ksize, ksize), jnp.float32, -bndc, bndc)
        conv_b = jax.random.uniform(k6, (1,), jnp.float32, -bndc, bndc)

        out = jax.block_until_ready(
            cbam_pallas(x, w1, b1, w2, b2, conv_w, conv_b, ksize=ksize))
        ref = jax.block_until_ready(
            cbam_reference(x, w1, b1, w2, b2, conv_w, conv_b, ksize=ksize))
        np.testing.assert_allclose(np.asarray(out), np.asarray(ref),
                                   rtol=1e-4, atol=1e-4)

    key = jax.random.PRNGKey(0)
    k_a, k_b = jax.random.split(key)
    run_case(k_a, B=2, C=32, H=16, W=16)    # Bblk=1, grid=(2,), single conv chunk
    run_case(k_b, B=32, C=32, H=16, W=16)   # Bblk=16, grid=(2,), chunked conv path
    print("KERNEL_OK")
</pallas_src>

<mosaic_0001>
module attributes {stable_mosaic.version = 11 : i64} {
  func.func @_cbam_kernel(%arg0: i32, %arg1: memref<1x32x256xf32, #tpu.memory_space<vmem>>, %arg2: memref<32x2xf32, #tpu.memory_space<vmem>>, %arg3: memref<1x2xf32, #tpu.memory_space<vmem>>, %arg4: memref<2x32xf32, #tpu.memory_space<vmem>>, %arg5: memref<1x32xf32, #tpu.memory_space<vmem>>, %arg6: memref<2x49xf32, #tpu.memory_space<vmem>>, %arg7: memref<14x256xf32, #tpu.memory_space<vmem>>, %arg8: memref<1xf32, #tpu.memory_space<smem>>, %arg9: memref<1x32x256xf32, #tpu.memory_space<vmem>>, %arg10: memref<2x256xf32, #tpu.memory_space<vmem>>, %arg11: memref<2x256xf32, #tpu.memory_space<vmem>>) attributes {dimension_semantics = [#tpu.dimension_semantics<parallel>], iteration_bounds = array<i64: 2>, scalar_prefetch = 0 : i64, scratch_operands = 2 : i64, tpu.core_type = #tpu.core_type<tc>, window_params = [{transform_indices = @transform_0, window_bounds = array<i64: 1, 32, 256>}, {pipeline_mode = #tpu.pipeline_mode<synchronous>, transform_indices = @transform_1, window_bounds = array<i64: 32, 2>}, {pipeline_mode = #tpu.pipeline_mode<synchronous>, transform_indices = @transform_2, window_bounds = array<i64: 1, 2>}, {pipeline_mode = #tpu.pipeline_mode<synchronous>, transform_indices = @transform_3, window_bounds = array<i64: 2, 32>}, {pipeline_mode = #tpu.pipeline_mode<synchronous>, transform_indices = @transform_4, window_bounds = array<i64: 1, 32>}, {pipeline_mode = #tpu.pipeline_mode<synchronous>, transform_indices = @transform_5, window_bounds = array<i64: 2, 49>}, {pipeline_mode = #tpu.pipeline_mode<synchronous>, transform_indices = @transform_6, window_bounds = array<i64: 14, 256>}, {transform_indices = @transform_7, window_bounds = array<i64: 1>}, {transform_indices = @transform_8, window_bounds = array<i64: 1, 32, 256>}]} {
    %c0 = arith.constant 0 : index
    %c0_0 = arith.constant 0 : index
    %c0_1 = arith.constant 0 : index
    %0 = vector.load %arg1[%c0, %c0_0, %c0_1] : memref<1x32x256xf32, #tpu.memory_space<vmem>>, vector<1x32x256xf32>
    %cst = arith.constant dense<0.000000e+00> : vector<1x32xf32>
    %1 = vector.multi_reduction <add>, %0, %cst [2] : vector<1x32x256xf32> to vector<1x32xf32>
    %cst_2 = arith.constant 2.560000e+02 : f32
    %2 = vector.broadcast %cst_2 : f32 to vector<1x32xf32>
    %3 = arith.divf %1, %2 : vector<1x32xf32>
    %cst_3 = arith.constant dense<0xFF800000> : vector<1x32xf32>
    %4 = vector.multi_reduction <maximumf>, %0, %cst_3 [2] : vector<1x32x256xf32> to vector<1x32xf32>
    %5 = tpu.concatenate %3, %4 in 0 : vector<1x32xf32>, vector<1x32xf32> -> vector<2x32xf32>
    %c0_4 = arith.constant 0 : index
    %c0_5 = arith.constant 0 : index
    %6 = vector.load %arg2[%c0_4, %c0_5] : memref<32x2xf32, #tpu.memory_space<vmem>>, vector<32x2xf32>
    %cst_6 = arith.constant dense<0.000000e+00> : vector<2x2xf32>
    %7 = tpu.matmul %5, %6, %cst_6 {dimension_numbers = #tpu.dot_dimension_numbers<[1], [0], [0], [1], [0, 0, 1, 1], [], []>} : vector<2x32xf32>, vector<32x2xf32>, vector<2x2xf32> -> vector<2x2xf32>
    %c0_7 = arith.constant 0 : index
    %c0_8 = arith.constant 0 : index
    %8 = vector.load %arg3[%c0_7, %c0_8] : memref<1x2xf32, #tpu.memory_space<vmem>>, vector<1x2xf32>
    %9 = vector.broadcast %8 : vector<1x2xf32> to vector<2x2xf32>
    %10 = arith.addf %7, %9 : vector<2x2xf32>
    %cst_9 = arith.constant 0.000000e+00 : f32
    %11 = vector.broadcast %cst_9 : f32 to vector<2x2xf32>
    %12 = arith.maximumf %10, %11 : vector<2x2xf32>
    %c0_10 = arith.constant 0 : index
    %c0_11 = arith.constant 0 : index
    %13 = vector.load %arg4[%c0_10, %c0_11] : memref<2x32xf32, #tpu.memory_space<vmem>>, vector<2x32xf32>
    %cst_12 = arith.constant dense<0.000000e+00> : vector<2x32xf32>
    %14 = tpu.matmul %12, %13, %cst_12 {dimension_numbers = #tpu.dot_dimension_numbers<[1], [0], [0], [1], [0, 0, 1, 1], [], []>} : vector<2x2xf32>, vector<2x32xf32>, vector<2x32xf32> -> vector<2x32xf32>
    %c0_13 = arith.constant 0 : index
    %c0_14 = arith.constant 0 : index
    %15 = vector.load %arg5[%c0_13, %c0_14] : memref<1x32xf32, #tpu.memory_space<vmem>>, vector<1x32xf32>
    %16 = vector.broadcast %15 : vector<1x32xf32> to vector<2x32xf32>
    %17 = arith.addf %14, %16 : vector<2x32xf32>
    %18 = vector.extract_strided_slice %17 {offsets = [0, 0], sizes = [1, 32], strides = [1, 1]} : vector<2x32xf32> to vector<1x32xf32>
    %19 = vector.extract_strided_slice %17 {offsets = [1, 0], sizes = [1, 32], strides = [1, 1]} : vector<2x32xf32> to vector<1x32xf32>
    %20 = arith.addf %18, %19 : vector<1x32xf32>
    %21 = arith.negf %20 : vector<1x32xf32>
    %22 = math.exp %21 : vector<1x32xf32>
    %cst_15 = arith.constant 1.000000e+00 : f32
    %23 = vector.broadcast %cst_15 : f32 to vector<1x32xf32>
    %24 = arith.addf %23, %22 : vector<1x32xf32>
    %25 = arith.divf %23, %24 : vector<1x32xf32>
    %26 = vector.shape_cast %25 : vector<1x32xf32> to vector<1x32x1xf32>
    %27 = vector.broadcast %26 : vector<1x32x1xf32> to vector<1x32x256xf32>
    %28 = arith.mulf %0, %27 : vector<1x32x256xf32>
    %c0_16 = arith.constant 0 : index
    %c0_17 = arith.constant 0 : index
    %c0_18 = arith.constant 0 : index
    %29 = vector.load %arg9[%c0_16, %c0_17, %c0_18] : memref<1x32x256xf32, #tpu.memory_space<vmem>>, vector<1x32x256xf32>
    tpu.vector_store %arg9[%c0_16, %c0_17, %c0_18], %28 {strides = array<i32>} : memref<1x32x256xf32, #tpu.memory_space<vmem>>, vector<1x32x256xf32>,
    %c0_19 = arith.constant 0 : index
    %c0_20 = arith.constant 0 : index
    %c0_21 = arith.constant 0 : index
    %30 = vector.load %arg9[%c0_19, %c0_20, %c0_21] : memref<1x32x256xf32, #tpu.memory_space<vmem>>, vector<1x32x256xf32>
    %cst_22 = arith.constant dense<0.000000e+00> : vector<1x256xf32>
    %31 = vector.multi_reduction <add>, %30, %cst_22 [1] : vector<1x32x256xf32> to vector<1x256xf32>
    %cst_23 = arith.constant 3.200000e+01 : f32
    %32 = vector.broadcast %cst_23 : f32 to vector<1x256xf32>
    %33 = arith.divf %31, %32 : vector<1x256xf32>
    %c0_24 = arith.constant 0 : index
    %c0_25 = arith.constant 0 : index
    %34 = vector.load %arg10[%c0_24, %c0_25] : memref<2x256xf32, #tpu.memory_space<vmem>>, vector<1x256xf32>
    tpu.vector_store %arg10[%c0_24, %c0_25], %33 {strides = array<i32>} : memref<2x256xf32, #tpu.memory_space<vmem>>, vector<1x256xf32>,
    %cst_26 = arith.constant dense<0xFF800000> : vector<1x256xf32>
    %35 = vector.multi_reduction <maximumf>, %30, %cst_26 [1] : vector<1x32x256xf32> to vector<1x256xf32>
    %c1 = arith.constant 1 : index
    %c0_27 = arith.constant 0 : index
    %36 = vector.load %arg10[%c1, %c0_27] : memref<2x256xf32, #tpu.memory_space<vmem>>, vector<1x256xf32>
    tpu.vector_store %arg10[%c1, %c0_27], %35 {strides = array<i32>} : memref<2x256xf32, #tpu.memory_space<vmem>>, vector<1x256xf32>,
    %c0_28 = arith.constant 0 : index
    %c0_29 = arith.constant 0 : index
    %37 = vector.load %arg10[%c0_28, %c0_29] : memref<2x256xf32, #tpu.memory_space<vmem>>, vector<2x256xf32>
    %c3_i32 = arith.constant 3 : i32
    %38 = tpu.dynamic_rotate %37 by %c3_i32 dim 1 : vector<2x256xf32>, i32 -> vector<2x256xf32>
    %c0_30 = arith.constant 0 : index
    %c0_31 = arith.constant 0 : index
    %39 = vector.load %arg7[%c0_30, %c0_31] : memref<14x256xf32, #tpu.memory_space<vmem>>, vector<1x256xf32>
    %40 = vector.broadcast %39 : vector<1x256xf32> to vector<2x256xf32>
    %41 = arith.mulf %38, %40 : vector<2x256xf32>
    %c2_i32 = arith.constant 2 : i32
    %42 = tpu.dynamic_rotate %37 by %c2_i32 dim 1 : vector<2x256xf32>, i32 -> vector<2x256xf32>
    %c1_32 = arith.constant 1 : index
    %c0_33 = arith.constant 0 : index
    %43 = vector.load %arg7[%c1_32, %c0_33] : memref<14x256xf32, #tpu.memory_space<vmem>>, vector<1x256xf32>
    %44 = vector.broadcast %43 : vector<1x256xf32> to vector<2x256xf32>
    %45 = arith.mulf %42, %44 : vector<2x256xf32>
    %c1_i32 = arith.constant 1 : i32
    %46 = tpu.dynamic_rotate %37 by %c1_i32 dim 1 : vector<2x256xf32>, i32 -> vector<2x256xf32>
    %c2 = arith.constant 2 : index
    %c0_34 = arith.constant 0 : index
    %47 = vector.load %arg7[%c2, %c0_34] : memref<14x256xf32, #tpu.memory_space<vmem>>, vector<1x256xf32>
    %48 = vector.broadcast %47 : vector<1x256xf32> to vector<2x256xf32>
    %49 = arith.mulf %46, %48 : vector<2x256xf32>
    %c3 = arith.constant 3 : index
    %c0_35 = arith.constant 0 : index
    %50 = vector.load %arg7[%c3, %c0_35] : memref<14x256xf32, #tpu.memory_space<vmem>>, vector<1x256xf32>
    %51 = vector.broadcast %50 : vector<1x256xf32> to vector<2x256xf32>
    %52 = arith.mulf %37, %51 : vector<2x256xf32>
    %c255_i32 = arith.constant 255 : i32
    %53 = tpu.dynamic_rotate %37 by %c255_i32 dim 1 : vector<2x256xf32>, i32 -> vector<2x256xf32>
    %c4 = arith.constant 4 : index
    %c0_36 = arith.constant 0 : index
    %54 = vector.load %arg7[%c4, %c0_36] : memref<14x256xf32, #tpu.memory_space<vmem>>, vector<1x256xf32>
    %55 = vector.broadcast %54 : vector<1x256xf32> to vector<2x256xf32>
    %56 = arith.mulf %53, %55 : vector<2x256xf32>
    %c254_i32 = arith.constant 254 : i32
    %57 = tpu.dynamic_rotate %37 by %c254_i32 dim 1 : vector<2x256xf32>, i32 -> vector<2x256xf32>
    %c5 = arith.constant 5 : index
    %c0_37 = arith.constant 0 : index
    %58 = vector.load %arg7[%c5, %c0_37] : memref<14x256xf32, #tpu.memory_space<vmem>>, vector<1x256xf32>
    %59 = vector.broadcast %58 : vector<1x256xf32> to vector<2x256xf32>
    %60 = arith.mulf %57, %59 : vector<2x256xf32>
    %c253_i32 = arith.constant 253 : i32
    %61 = tpu.dynamic_rotate %37 by %c253_i32 dim 1 : vector<2x256xf32>, i32 -> vector<2x256xf32>
    %c6 = arith.constant 6 : index
    %c0_38 = arith.constant 0 : index
    %62 = vector.load %arg7[%c6, %c0_38] : memref<14x256xf32, #tpu.memory_space<vmem>>, vector<1x256xf32>
    %63 = vector.broadcast %62 : vector<1x256xf32> to vector<2x256xf32>
    %64 = arith.mulf %61, %63 : vector<2x256xf32>
    %c0_39 = arith.constant 0 : index
    %c0_40 = arith.constant 0 : index
    %65 = vector.load %arg6[%c0_39, %c0_40] : memref<2x49xf32, #tpu.memory_space<vmem>>, vector<2x1xf32>
    %66 = vector.broadcast %65 : vector<2x1xf32> to vector<2x256xf32>
    %67 = arith.mulf %41, %66 : vector<2x256xf32>
    %c0_41 = arith.constant 0 : index
    %c1_42 = arith.constant 1 : index
    %68 = vector.load %arg6[%c0_41, %c1_42] : memref<2x49xf32, #tpu.memory_space<vmem>>, vector<2x1xf32>
    %69 = vector.broadcast %68 : vector<2x1xf32> to vector<2x256xf32>
    %70 = arith.mulf %45, %69 : vector<2x256xf32>
    %c0_43 = arith.constant 0 : index
    %c2_44 = arith.constant 2 : index
    %71 = vector.load %arg6[%c0_43, %c2_44] : memref<2x49xf32, #tpu.memory_space<vmem>>, vector<2x1xf32>
    %72 = vector.broadcast %71 : vector<2x1xf32> to vector<2x256xf32>
    %73 = arith.mulf %49, %72 : vector<2x256xf32>
    %c0_45 = arith.constant 0 : index
    %c3_46 = arith.constant 3 : index
    %74 = vector.load %arg6[%c0_45, %c3_46] : memref<2x49xf32, #tpu.memory_space<vmem>>, vector<2x1xf32>
    %75 = vector.broadcast %74 : vector<2x1xf32> to vector<2x256xf32>
    %76 = arith.mulf %52, %75 : vector<2x256xf32>
    %c0_47 = arith.constant 0 : index
    %c4_48 = arith.constant 4 : index
    %77 = vector.load %arg6[%c0_47, %c4_48] : memref<2x49xf32, #tpu.memory_space<vmem>>, vector<2x1xf32>
    %78 = vector.broadcast %77 : vector<2x1xf32> to vector<2x256xf32>
    %79 = arith.mulf %56, %78 : vector<2x256xf32>
    %c0_49 = arith.constant 0 : index
    %c5_50 = arith.constant 5 : index
    %80 = vector.load %arg6[%c0_49, %c5_50] : memref<2x49xf32, #tpu.memory_space<vmem>>, vector<2x1xf32>
    %81 = vector.broadcast %80 : vector<2x1xf32> to vector<2x256xf32>
    %82 = arith.mulf %60, %81 : vector<2x256xf32>
    %c0_51 = arith.constant 0 : index
    %c6_52 = arith.constant 6 : index
    %83 = vector.load %arg6[%c0_51, %c6_52] : memref<2x49xf32, #tpu.memory_space<vmem>>, vector<2x1xf32>
    %84 = vector.broadcast %83 : vector<2x1xf32> to vector<2x256xf32>
    %85 = arith.mulf %64, %84 : vector<2x256xf32>
    %86 = arith.addf %67, %70 : vector<2x256xf32>
    %87 = arith.addf %73, %76 : vector<2x256xf32>
    %88 = arith.addf %79, %82 : vector<2x256xf32>
    %89 = arith.addf %86, %87 : vector<2x256xf32>
    %90 = arith.addf %88, %85 : vector<2x256xf32>
    %91 = arith.addf %89, %90 : vector<2x256xf32>
    %c48_i32 = arith.constant 48 : i32
    %92 = tpu.dynamic_rotate %91 by %c48_i32 dim 1 : vector<2x256xf32>, i32 -> vector<2x256xf32>
    %c7 = arith.constant 7 : index
    %c0_53 = arith.constant 0 : index
    %93 = vector.load %arg7[%c7, %c0_53] : memref<14x256xf32, #tpu.memory_space<vmem>>, vector<1x256xf32>
    %94 = vector.broadcast %93 : vector<1x256xf32> to vector<2x256xf32>
    %95 = arith.mulf %92, %94 : vector<2x256xf32>
    %c0_54 = arith.constant 0 : index
    %c7_55 = arith.constant 7 : index
    %96 = vector.load %arg6[%c0_54, %c7_55] : memref<2x49xf32, #tpu.memory_space<vmem>>, vector<2x1xf32>
    %97 = vector.broadcast %96 : vector<2x1xf32> to vector<2x256xf32>
    %98 = arith.mulf %41, %97 : vector<2x256xf32>
    %c0_56 = arith.constant 0 : index
    %c8 = arith.constant 8 : index
    %99 = vector.load %arg6[%c0_56, %c8] : memref<2x49xf32, #tpu.memory_space<vmem>>, vector<2x1xf32>
    %100 = vector.broadcast %99 : vector<2x1xf32> to vector<2x256xf32>
    %101 = arith.mulf %45, %100 : vector<2x256xf32>
    %c0_57 = arith.constant 0 : index
    %c9 = arith.constant 9 : index
    %102 = vector.load %arg6[%c0_57, %c9] : memref<2x49xf32, #tpu.memory_space<vmem>>, vector<2x1xf32>
    %103 = vector.broadcast %102 : vector<2x1xf32> to vector<2x256xf32>
    %104 = arith.mulf %49, %103 : vector<2x256xf32>
    %c0_58 = arith.constant 0 : index
    %c10 = arith.constant 10 : index
    %105 = vector.load %arg6[%c0_58, %c10] : memref<2x49xf32, #tpu.memory_space<vmem>>, vector<2x1xf32>
    %106 = vector.broadcast %105 : vector<2x1xf32> to vector<2x256xf32>
    %107 = arith.mulf %52, %106 : vector<2x256xf32>
    %c0_59 = arith.constant 0 : index
    %c11 = arith.constant 11 : index
    %108 = vector.load %arg6[%c0_59, %c11] : memref<2x49xf32, #tpu.memory_space<vmem>>, vector<2x1xf32>
    %109 = vector.broadcast %108 : vector<2x1xf32> to vector<2x256xf32>
    %110 = arith.mulf %56, %109 : vector<2x256xf32>
    %c0_60 = arith.constant 0 : index
    %c12 = arith.constant 12 : index
    %111 = vector.load %arg6[%c0_60, %c12] : memref<2x49xf32, #tpu.memory_space<vmem>>, vector<2x1xf32>
    %112 = vector.broadcast %111 : vector<2x1xf32> to vector<2x256xf32>
    %113 = arith.mulf %60, %112 : vector<2x256xf32>
    %c0_61 = arith.constant 0 : index
    %c13 = arith.constant 13 : index
    %114 = vector.load %arg6[%c0_61, %c13] : memref<2x49xf32, #tpu.memory_space<vmem>>, vector<2x1xf32>
    %115 = vector.broadcast %114 : vector<2x1xf32> to vector<2x256xf32>
    %116 = arith.mulf %64, %115 : vector<2x256xf32>
    %117 = arith.addf %98, %101 : vector<2x256xf32>
    %118 = arith.addf %104, %107 : vector<2x256xf32>
    %119 = arith.addf %110, %113 : vector<2x256xf32>
    %120 = arith.addf %117, %118 : vector<2x256xf32>
    %121 = arith.addf %119, %116 : vector<2x256xf32>
    %122 = arith.addf %120, %121 : vector<2x256xf32>
    %c32_i32 = arith.constant 32 : i32
    %123 = tpu.dynamic_rotate %122 by %c32_i32 dim 1 : vector<2x256xf32>, i32 -> vector<2x256xf32>
    %c8_62 = arith.constant 8 : index
    %c0_63 = arith.constant 0 : index
    %124 = vector.load %arg7[%c8_62, %c0_63] : memref<14x256xf32, #tpu.memory_space<vmem>>, vector<1x256xf32>
    %125 = vector.broadcast %124 : vector<1x256xf32> to vector<2x256xf32>
    %126 = arith.mulf %123, %125 : vector<2x256xf32>
    %c0_64 = arith.constant 0 : index
    %c14 = arith.constant 14 : index
    %127 = vector.load %arg6[%c0_64, %c14] : memref<2x49xf32, #tpu.memory_space<vmem>>, vector<2x1xf32>
    %128 = vector.broadcast %127 : vector<2x1xf32> to vector<2x256xf32>
    %129 = arith.mulf %41, %128 : vector<2x256xf32>
    %c0_65 = arith.constant 0 : index
    %c15 = arith.constant 15 : index
    %130 = vector.load %arg6[%c0_65, %c15] : memref<2x49xf32, #tpu.memory_space<vmem>>, vector<2x1xf32>
    %131 = vector.broadcast %130 : vector<2x1xf32> to vector<2x256xf32>
    %132 = arith.mulf %45, %131 : vector<2x256xf32>
    %c0_66 = arith.constant 0 : index
    %c16 = arith.constant 16 : index
    %133 = vector.load %arg6[%c0_66, %c16] : memref<2x49xf32, #tpu.memory_space<vmem>>, vector<2x1xf32>
    %134 = vector.broadcast %133 : vector<2x1xf32> to vector<2x256xf32>
    %135 = arith.mulf %49, %134 : vector<2x256xf32>
    %c0_67 = arith.constant 0 : index
    %c17 = arith.constant 17 : index
    %136 = vector.load %arg6[%c0_67, %c17] : memref<2x49xf32, #tpu.memory_space<vmem>>, vector<2x1xf32>
    %137 = vector.broadcast %136 : vector<2x1xf32> to vector<2x256xf32>
    %138 = arith.mulf %52, %137 : vector<2x256xf32>
    %c0_68 = arith.constant 0 : index
    %c18 = arith.constant 18 : index
    %139 = vector.load %arg6[%c0_68, %c18] : memref<2x49xf32, #tpu.memory_space<vmem>>, vector<2x1xf32>
    %140 = vector.broadcast %139 : vector<2x1xf32> to vector<2x256xf32>
    %141 = arith.mulf %56, %140 : vector<2x256xf32>
    %c0_69 = arith.constant 0 : index
    %c19 = arith.constant 19 : index
    %142 = vector.load %arg6[%c0_69, %c19] : memref<2x49xf32, #tpu.memory_space<vmem>>, vector<2x1xf32>
    %143 = vector.broadcast %142 : vector<2x1xf32> to vector<2x256xf32>
    %144 = arith.mulf %60, %143 : vector<2x256xf32>
    %c0_70 = arith.constant 0 : index
    %c20 = arith.constant 20 : index
    %145 = vector.load %arg6[%c0_70, %c20] : memref<2x49xf32, #tpu.memory_space<vmem>>, vector<2x1xf32>
    %146 = vector.broadcast %145 : vector<2x1xf32> to vector<2x256xf32>
    %147 = arith.mulf %64, %146 : vector<2x256xf32>
    %148 = arith.addf %129, %132 : vector<2x256xf32>
    %149 = arith.addf %135, %138 : vector<2x256xf32>
    %150 = arith.addf %141, %144 : vector<2x256xf32>
    %151 = arith.addf %148, %149 : vector<2x256xf32>
    %152 = arith.addf %150, %147 : vector<2x256xf32>
    %153 = arith.addf %151, %152 : vector<2x256xf32>
    %c16_i32 = arith.constant 16 : i32
    %154 = tpu.dynamic_rotate %153 by %c16_i32 dim 1 : vector<2x256xf32>, i32 -> vector<2x256xf32>
    %c9_71 = arith.constant 9 : index
    %c0_72 = arith.constant 0 : index
    %155 = vector.load %arg7[%c9_71, %c0_72] : memref<14x256xf32, #tpu.memory_space<vmem>>, vector<1x256xf32>
    %156 = vector.broadcast %155 : vector<1x256xf32> to vector<2x256xf32>
    %157 = arith.mulf %154, %156 : vector<2x256xf32>
    %c0_73 = arith.constant 0 : index
    %c21 = arith.constant 21 : index
    %158 = vector.load %arg6[%c0_73, %c21] : memref<2x49xf32, #tpu.memory_space<vmem>>, vector<2x1xf32>
    %159 = vector.broadcast %158 : vector<2x1xf32> to vector<2x256xf32>
    %160 = arith.mulf %41, %159 : vector<2x256xf32>
    %c0_74 = arith.constant 0 : index
    %c22 = arith.constant 22 : index
    %161 = vector.load %arg6[%c0_74, %c22] : memref<2x49xf32, #tpu.memory_space<vmem>>, vector<2x1xf32>
    %162 = vector.broadcast %161 : vector<2x1xf32> to vector<2x256xf32>
    %163 = arith.mulf %45, %162 : vector<2x256xf32>
    %c0_75 = arith.constant 0 : index
    %c23 = arith.constant 23 : index
    %164 = vector.load %arg6[%c0_75, %c23] : memref<2x49xf32, #tpu.memory_space<vmem>>, vector<2x1xf32>
    %165 = vector.broadcast %164 : vector<2x1xf32> to vector<2x256xf32>
    %166 = arith.mulf %49, %165 : vector<2x256xf32>
    %c0_76 = arith.constant 0 : index
    %c24 = arith.constant 24 : index
    %167 = vector.load %arg6[%c0_76, %c24] : memref<2x49xf32, #tpu.memory_space<vmem>>, vector<2x1xf32>
    %168 = vector.broadcast %167 : vector<2x1xf32> to vector<2x256xf32>
    %169 = arith.mulf %52, %168 : vector<2x256xf32>
    %c0_77 = arith.constant 0 : index
    %c25 = arith.constant 25 : index
    %170 = vector.load %arg6[%c0_77, %c25] : memref<2x49xf32, #tpu.memory_space<vmem>>, vector<2x1xf32>
    %171 = vector.broadcast %170 : vector<2x1xf32> to vector<2x256xf32>
    %172 = arith.mulf %56, %171 : vector<2x256xf32>
    %c0_78 = arith.constant 0 : index
    %c26 = arith.constant 26 : index
    %173 = vector.load %arg6[%c0_78, %c26] : memref<2x49xf32, #tpu.memory_space<vmem>>, vector<2x1xf32>
    %174 = vector.broadcast %173 : vector<2x1xf32> to vector<2x256xf32>
    %175 = arith.mulf %60, %174 : vector<2x256xf32>
    %c0_79 = arith.constant 0 : index
    %c27 = arith.constant 27 : index
    %176 = vector.load %arg6[%c0_79, %c27] : memref<2x49xf32, #tpu.memory_space<vmem>>, vector<2x1xf32>
    %177 = vector.broadcast %176 : vector<2x1xf32> to vector<2x256xf32>
    %178 = arith.mulf %64, %177 : vector<2x256xf32>
    %179 = arith.addf %160, %163 : vector<2x256xf32>
    %180 = arith.addf %166, %169 : vector<2x256xf32>
    %181 = arith.addf %172, %175 : vector<2x256xf32>
    %182 = arith.addf %179, %180 : vector<2x256xf32>
    %183 = arith.addf %181, %178 : vector<2x256xf32>
    %184 = arith.addf %182, %183 : vector<2x256xf32>
    %c10_80 = arith.constant 10 : index
    %c0_81 = arith.constant 0 : index
    %185 = vector.load %arg7[%c10_80, %c0_81] : memref<14x256xf32, #tpu.memory_space<vmem>>, vector<1x256xf32>
    %186 = vector.broadcast %185 : vector<1x256xf32> to vector<2x256xf32>
    %187 = arith.mulf %184, %186 : vector<2x256xf32>
    %c0_82 = arith.constant 0 : index
    %c28 = arith.constant 28 : index
    %188 = vector.load %arg6[%c0_82, %c28] : memref<2x49xf32, #tpu.memory_space<vmem>>, vector<2x1xf32>
    %189 = vector.broadcast %188 : vector<2x1xf32> to vector<2x256xf32>
    %190 = arith.mulf %41, %189 : vector<2x256xf32>
    %c0_83 = arith.constant 0 : index
    %c29 = arith.constant 29 : index
    %191 = vector.load %arg6[%c0_83, %c29] : memref<2x49xf32, #tpu.memory_space<vmem>>, vector<2x1xf32>
    %192 = vector.broadcast %191 : vector<2x1xf32> to vector<2x256xf32>
    %193 = arith.mulf %45, %192 : vector<2x256xf32>
    %c0_84 = arith.constant 0 : index
    %c30 = arith.constant 30 : index
    %194 = vector.load %arg6[%c0_84, %c30] : memref<2x49xf32, #tpu.memory_space<vmem>>, vector<2x1xf32>
    %195 = vector.broadcast %194 : vector<2x1xf32> to vector<2x256xf32>
    %196 = arith.mulf %49, %195 : vector<2x256xf32>
    %c0_85 = arith.constant 0 : index
    %c31 = arith.constant 31 : index
    %197 = vector.load %arg6[%c0_85, %c31] : memref<2x49xf32, #tpu.memory_space<vmem>>, vector<2x1xf32>
    %198 = vector.broadcast %197 : vector<2x1xf32> to vector<2x256xf32>
    %199 = arith.mulf %52, %198 : vector<2x256xf32>
    %c0_86 = arith.constant 0 : index
    %c32 = arith.constant 32 : index
    %200 = vector.load %arg6[%c0_86, %c32] : memref<2x49xf32, #tpu.memory_space<vmem>>, vector<2x1xf32>
    %201 = vector.broadcast %200 : vector<2x1xf32> to vector<2x256xf32>
    %202 = arith.mulf %56, %201 : vector<2x256xf32>
    %c0_87 = arith.constant 0 : index
    %c33 = arith.constant 33 : index
    %203 = vector.load %arg6[%c0_87, %c33] : memref<2x49xf32, #tpu.memory_space<vmem>>, vector<2x1xf32>
    %204 = vector.broadcast %203 : vector<2x1xf32> to vector<2x256xf32>
    %205 = arith.mulf %60, %204 : vector<2x256xf32>
    %c0_88 = arith.constant 0 : index
    %c34 = arith.constant 34 : index
    %206 = vector.load %arg6[%c0_88, %c34] : memref<2x49xf32, #tpu.memory_space<vmem>>, vector<2x1xf32>
    %207 = vector.broadcast %206 : vector<2x1xf32> to vector<2x256xf32>
    %208 = arith.mulf %64, %207 : vector<2x256xf32>
    %209 = arith.addf %190, %193 : vector<2x256xf32>
    %210 = arith.addf %196, %199 : vector<2x256xf32>
    %211 = arith.addf %202, %205 : vector<2x256xf32>
    %212 = arith.addf %209, %210 : vector<2x256xf32>
    %213 = arith.addf %211, %208 : vector<2x256xf32>
    %214 = arith.addf %212, %213 : vector<2x256xf32>
    %c240_i32 = arith.constant 240 : i32
    %215 = tpu.dynamic_rotate %214 by %c240_i32 dim 1 : vector<2x256xf32>, i32 -> vector<2x256xf32>
    %c11_89 = arith.constant 11 : index
    %c0_90 = arith.constant 0 : index
    %216 = vector.load %arg7[%c11_89, %c0_90] : memref<14x256xf32, #tpu.memory_space<vmem>>, vector<1x256xf32>
    %217 = vector.broadcast %216 : vector<1x256xf32> to vector<2x256xf32>
    %218 = arith.mulf %215, %217 : vector<2x256xf32>
    %c0_91 = arith.constant 0 : index
    %c35 = arith.constant 35 : index
    %219 = vector.load %arg6[%c0_91, %c35] : memref<2x49xf32, #tpu.memory_space<vmem>>, vector<2x1xf32>
    %220 = vector.broadcast %219 : vector<2x1xf32> to vector<2x256xf32>
    %221 = arith.mulf %41, %220 : vector<2x256xf32>
    %c0_92 = arith.constant 0 : index
    %c36 = arith.constant 36 : index
    %222 = vector.load %arg6[%c0_92, %c36] : memref<2x49xf32, #tpu.memory_space<vmem>>, vector<2x1xf32>
    %223 = vector.broadcast %222 : vector<2x1xf32> to vector<2x256xf32>
    %224 = arith.mulf %45, %223 : vector<2x256xf32>
    %c0_93 = arith.constant 0 : index
    %c37 = arith.constant 37 : index
    %225 = vector.load %arg6[%c0_93, %c37] : memref<2x49xf32, #tpu.memory_space<vmem>>, vector<2x1xf32>
    %226 = vector.broadcast %225 : vector<2x1xf32> to vector<2x256xf32>
    %227 = arith.mulf %49, %226 : vector<2x256xf32>
    %c0_94 = arith.constant 0 : index
    %c38 = arith.constant 38 : index
    %228 = vector.load %arg6[%c0_94, %c38] : memref<2x49xf32, #tpu.memory_space<vmem>>, vector<2x1xf32>
    %229 = vector.broadcast %228 : vector<2x1xf32> to vector<2x256xf32>
    %230 = arith.mulf %52, %229 : vector<2x256xf32>
    %c0_95 = arith.constant 0 : index
    %c39 = arith.constant 39 : index
    %231 = vector.load %arg6[%c0_95, %c39] : memref<2x49xf32, #tpu.memory_space<vmem>>, vector<2x1xf32>
    %232 = vector.broadcast %231 : vector<2x1xf32> to vector<2x256xf32>
    %233 = arith.mulf %56, %232 : vector<2x256xf32>
    %c0_96 = arith.constant 0 : index
    %c40 = arith.constant 40 : index
    %234 = vector.load %arg6[%c0_96, %c40] : memref<2x49xf32, #tpu.memory_space<vmem>>, vector<2x1xf32>
    %235 = vector.broadcast %234 : vector<2x1xf32> to vector<2x256xf32>
    %236 = arith.mulf %60, %235 : vector<2x256xf32>
    %c0_97 = arith.constant 0 : index
    %c41 = arith.constant 41 : index
    %237 = vector.load %arg6[%c0_97, %c41] : memref<2x49xf32, #tpu.memory_space<vmem>>, vector<2x1xf32>
    %238 = vector.broadcast %237 : vector<2x1xf32> to vector<2x256xf32>
    %239 = arith.mulf %64, %238 : vector<2x256xf32>
    %240 = arith.addf %221, %224 : vector<2x256xf32>
    %241 = arith.addf %227, %230 : vector<2x256xf32>
    %242 = arith.addf %233, %236 : vector<2x256xf32>
    %243 = arith.addf %240, %241 : vector<2x256xf32>
    %244 = arith.addf %242, %239 : vector<2x256xf32>
    %245 = arith.addf %243, %244 : vector<2x256xf32>
    %c224_i32 = arith.constant 224 : i32
    %246 = tpu.dynamic_rotate %245 by %c224_i32 dim 1 : vector<2x256xf32>, i32 -> vector<2x256xf32>
    %c12_98 = arith.constant 12 : index
    %c0_99 = arith.constant 0 : index
    %247 = vector.load %arg7[%c12_98, %c0_99] : memref<14x256xf32, #tpu.memory_space<vmem>>, vector<1x256xf32>
    %248 = vector.broadcast %247 : vector<1x256xf32> to vector<2x256xf32>
    %249 = arith.mulf %246, %248 : vector<2x256xf32>
    %c0_100 = arith.constant 0 : index
    %c42 = arith.constant 42 : index
    %250 = vector.load %arg6[%c0_100, %c42] : memref<2x49xf32, #tpu.memory_space<vmem>>, vector<2x1xf32>
    %251 = vector.broadcast %250 : vector<2x1xf32> to vector<2x256xf32>
    %252 = arith.mulf %41, %251 : vector<2x256xf32>
    %c0_101 = arith.constant 0 : index
    %c43 = arith.constant 43 : index
    %253 = vector.load %arg6[%c0_101, %c43] : memref<2x49xf32, #tpu.memory_space<vmem>>, vector<2x1xf32>
    %254 = vector.broadcast %253 : vector<2x1xf32> to vector<2x256xf32>
    %255 = arith.mulf %45, %254 : vector<2x256xf32>
    %c0_102 = arith.constant 0 : index
    %c44 = arith.constant 44 : index
    %256 = vector.load %arg6[%c0_102, %c44] : memref<2x49xf32, #tpu.memory_space<vmem>>, vector<2x1xf32>
    %257 = vector.broadcast %256 : vector<2x1xf32> to vector<2x256xf32>
    %258 = arith.mulf %49, %257 : vector<2x256xf32>
    %c0_103 = arith.constant 0 : index
    %c45 = arith.constant 45 : index
    %259 = vector.load %arg6[%c0_103, %c45] : memref<2x49xf32, #tpu.memory_space<vmem>>, vector<2x1xf32>
    %260 = vector.broadcast %259 : vector<2x1xf32> to vector<2x256xf32>
    %261 = arith.mulf %52, %260 : vector<2x256xf32>
    %c0_104 = arith.constant 0 : index
    %c46 = arith.constant 46 : index
    %262 = vector.load %arg6[%c0_104, %c46] : memref<2x49xf32, #tpu.memory_space<vmem>>, vector<2x1xf32>
    %263 = vector.broadcast %262 : vector<2x1xf32> to vector<2x256xf32>
    %264 = arith.mulf %56, %263 : vector<2x256xf32>
    %c0_105 = arith.constant 0 : index
    %c47 = arith.constant 47 : index
    %265 = vector.load %arg6[%c0_105, %c47] : memref<2x49xf32, #tpu.memory_space<vmem>>, vector<2x1xf32>
    %266 = vector.broadcast %265 : vector<2x1xf32> to vector<2x256xf32>
    %267 = arith.mulf %60, %266 : vector<2x256xf32>
    %c0_106 = arith.constant 0 : index
    %c48 = arith.constant 48 : index
    %268 = vector.load %arg6[%c0_106, %c48] : memref<2x49xf32, #tpu.memory_space<vmem>>, vector<2x1xf32>
    %269 = vector.broadcast %268 : vector<2x1xf32> to vector<2x256xf32>
    %270 = arith.mulf %64, %269 : vector<2x256xf32>
    %271 = arith.addf %252, %255 : vector<2x256xf32>
    %272 = arith.addf %258, %261 : vector<2x256xf32>
    %273 = arith.addf %264, %267 : vector<2x256xf32>
    %274 = arith.addf %271, %272 : vector<2x256xf32>
    %275 = arith.addf %273, %270 : vector<2x256xf32>
    %276 = arith.addf %274, %275 : vector<2x256xf32>
    %c208_i32 = arith.constant 208 : i32
    %277 = tpu.dynamic_rotate %276 by %c208_i32 dim 1 : vector<2x256xf32>, i32 -> vector<2x256xf32>
    %c13_107 = arith.constant 13 : index
    %c0_108 = arith.constant 0 : index
    %278 = vector.load %arg7[%c13_107, %c0_108] : memref<14x256xf32, #tpu.memory_space<vmem>>, vector<1x256xf32>
    %279 = vector.broadcast %278 : vector<1x256xf32> to vector<2x256xf32>
    %280 = arith.mulf %277, %279 : vector<2x256xf32>
    %281 = arith.addf %95, %126 : vector<2x256xf32>
    %282 = arith.addf %157, %187 : vector<2x256xf32>
    %283 = arith.addf %218, %249 : vector<2x256xf32>
    %284 = arith.addf %281, %282 : vector<2x256xf32>
    %285 = arith.addf %283, %280 : vector<2x256xf32>
    %286 = arith.addf %284, %285 : vector<2x256xf32>
    %c0_109 = arith.constant 0 : index
    %c0_110 = arith.constant 0 : index
    %287 = vector.load %arg11[%c0_109, %c0_110] : memref<2x256xf32, #tpu.memory_space<vmem>>, vector<2x256xf32>
    tpu.vector_store %arg11[%c0_109, %c0_110], %286 {strides = array<i32>} : memref<2x256xf32, #tpu.memory_space<vmem>>, vector<2x256xf32>,
    %c0_111 = arith.constant 0 : index
    %c0_112 = arith.constant 0 : index
    %288 = vector.load %arg11[%c0_111, %c0_112] : memref<2x256xf32, #tpu.memory_space<vmem>>, vector<1x256xf32>
    %c1_113 = arith.constant 1 : index
    %c0_114 = arith.constant 0 : index
    %289 = vector.load %arg11[%c1_113, %c0_114] : memref<2x256xf32, #tpu.memory_space<vmem>>, vector<1x256xf32>
    %290 = arith.addf %288, %289 : vector<1x256xf32>
    %c0_115 = arith.constant 0 : index
    %291 = memref.load %arg8[%c0_115] : memref<1xf32, #tpu.memory_space<smem>>
    %292 = vector.broadcast %291 : f32 to vector<1x256xf32>
    %293 = arith.addf %290, %292 : vector<1x256xf32>
    %294 = arith.negf %293 : vector<1x256xf32>
    %295 = math.exp %294 : vector<1x256xf32>
    %cst_116 = arith.constant 1.000000e+00 : f32
    %296 = vector.broadcast %cst_116 : f32 to vector<1x256xf32>
    %297 = arith.addf %296, %295 : vector<1x256xf32>
    %298 = arith.divf %296, %297 : vector<1x256xf32>
    %c0_117 = arith.constant 0 : index
    %c0_118 = arith.constant 0 : index
    %c0_119 = arith.constant 0 : index
    %299 = vector.load %arg9[%c0_117, %c0_118, %c0_119] : memref<1x32x256xf32, #tpu.memory_space<vmem>>, vector<1x32x256xf32>
    %300 = vector.shape_cast %298 : vector<1x256xf32> to vector<1x1x256xf32>
    %301 = vector.broadcast %300 : vector<1x1x256xf32> to vector<1x32x256xf32>
    %302 = arith.mulf %299, %301 : vector<1x32x256xf32>
    %c0_120 = arith.constant 0 : index
    %c0_121 = arith.constant 0 : index
    %c0_122 = arith.constant 0 : index
    %303 = vector.load %arg9[%c0_120, %c0_121, %c0_122] : memref<1x32x256xf32, #tpu.memory_space<vmem>>, vector<1x32x256xf32>
    tpu.vector_store %arg9[%c0_120, %c0_121, %c0_122], %302 {strides = array<i32>} : memref<1x32x256xf32, #tpu.memory_space<vmem>>, vector<1x32x256xf32>,
    return
  }
  func.func @transform_0(%arg0: i32) -> (i32, i32, i32) {
    %c0_i32 = arith.constant 0 : i32
    %c0_i32_0 = arith.constant 0 : i32
    %c0_i32_1 = arith.constant 0 : i32
    return %arg0, %c0_i32, %c0_i32_0 : i32, i32, i32
  }
  func.func @transform_1(%arg0: i32) -> (i32, i32) {
    %c0_i32 = arith.constant 0 : i32
    %c0_i32_0 = arith.constant 0 : i32
    %c0_i32_1 = arith.constant 0 : i32
    return %c0_i32, %c0_i32_0 : i32, i32
  }
  func.func @transform_2(%arg0: i32) -> (i32, i32) {
    %c0_i32 = arith.constant 0 : i32
    %c0_i32_0 = arith.constant 0 : i32
    %c0_i32_1 = arith.constant 0 : i32
    return %c0_i32, %c0_i32_0 : i32, i32
  }
  func.func @transform_3(%arg0: i32) -> (i32, i32) {
    %c0_i32 = arith.constant 0 : i32
    %c0_i32_0 = arith.constant 0 : i32
    %c0_i32_1 = arith.constant 0 : i32
    return %c0_i32, %c0_i32_0 : i32, i32
  }
  func.func @transform_4(%arg0: i32) -> (i32, i32) {
    %c0_i32 = arith.constant 0 : i32
    %c0_i32_0 = arith.constant 0 : i32
    %c0_i32_1 = arith.constant 0 : i32
    return %c0_i32, %c0_i32_0 : i32, i32
  }
  func.func @transform_5(%arg0: i32) -> (i32, i32) {
    %c0_i32 = arith.constant 0 : i32
    %c0_i32_0 = arith.constant 0 : i32
    %c0_i32_1 = arith.constant 0 : i32
    return %c0_i32, %c0_i32_0 : i32, i32
  }
  func.func @transform_6(%arg0: i32) -> (i32, i32) {
    %c0_i32 = arith.constant 0 : i32
    %c0_i32_0 = arith.constant 0 : i32
    %c0_i32_1 = arith.constant 0 : i32
    return %c0_i32, %c0_i32_0 : i32, i32
  }
  func.func @transform_7(%arg0: i32) -> i32 {
    %c0_i32 = arith.constant 0 : i32
    %c0_i32_0 = arith.constant 0 : i32
    return %c0_i32 : i32
  }
  func.func @transform_8(%arg0: i32) -> (i32, i32, i32) {
    %c0_i32 = arith.constant 0 : i32
    %c0_i32_0 = arith.constant 0 : i32
    %c0_i32_1 = arith.constant 0 : i32
    return %arg0, %c0_i32, %c0_i32_0 : i32, i32, i32
  }
}

</mosaic_0001>

<llo_original>
// kernel: tpu_custom_call.1
$region0: #{tpu_custom_call.1}
  #allocation0 [shape = 'u32[]', space=smem, size = 0x4, offset = 0x4, fixed_abs, tag = 'smem constant byte address 0x4 - core index']
  #allocation1 [shape = 'u32[72,128]{1,0:T(1,128)}', space=vmem, size = 0x9000, scoped, tag = 'internal scratch']
  #allocation2 [shape = 'f32[2,256]{1,0:T(2,128)}', space=vmem, size = 0x800, scoped, tag = 'scratch operand']
  #allocation3 [shape = 'f32[2,256]{1,0:T(2,128)}', space=vmem, size = 0x800, scoped, tag = 'scratch operand']
  #allocation4 [shape = 'f32[1]{0:T(128)S(6)}', space=smem, size = 0x200, scoped, tag = 'scoped memory for tpu_custom_call.1']
  %s0 = inlined_call_operand.hbm [shape: f32[2,32,256], index: 0, kind: input, shape index: {}]
  %s1 = inlined_call_operand.vmem [shape: f32[32,2], index: 1, kind: input, shape index: {}]
  %s2 = inlined_call_operand.hbm [shape: f32[1,2], index: 2, kind: input, shape index: {}]
  %s3 = inlined_call_operand.vmem [shape: f32[2,32], index: 3, kind: input, shape index: {}]
  %s4 = inlined_call_operand.vmem [shape: f32[1,32], index: 4, kind: input, shape index: {}]
  %s5 = inlined_call_operand.vmem [shape: f32[2,49], index: 5, kind: input, shape index: {}]
  %s6 = inlined_call_operand.vmem [shape: f32[14,256], index: 6, kind: input, shape index: {}]
  %s7 = inlined_call_operand.<no memory space> [shape: f32[1], index: 7, kind: input, shape index: {}]
  %s8 = inlined_call_operand.hbm [shape: f32[2,32,256], index: 8, kind: output, shape index: {}]
  %s9 = sld [smem:[#allocation0]]
  $region73: #{tpu_custom_call.1} parent=0
    _
  %s11 = ssub.s32 1, %s9
  %s12 = scalar_select 0, %s11, %s9
  %13 = sst [smem:[#allocation4]] %s7
  $region1: #{tpu_custom_call.1} parent=0
    #allocation5 [shape = 'u8[65536]{0}', space=vmem, size = 0x10000, scoped, tag = 'input window, operand 0']
    #allocation6 [shape = 's32[2]{0}', space=sflag, size = 0x8, scoped, tag = 'scoped memory for tpu_custom_call.1']
    #allocation7 [shape = 's32[2]{0}', space=sflag, size = 0x8, scoped, tag = 'scoped memory for tpu_custom_call.1']
    #allocation8 [shape = 'u8[512]{0}', space=vmem, size = 0x400, scoped, tag = 'input window, operand 2, single buffered']
    #allocation9 [shape = 's32[1]{0}', space=sflag, size = 0x4, scoped, tag = 'scoped memory for tpu_custom_call.1']
    #allocation10 [shape = 'u8[65536]{0}', space=vmem, size = 0x10000, scoped, tag = 'output window, operand 0']
    %14 = vsyncpa [#allocation6], 0
    %s15 = scalar_lea.sflag [#allocation6], 1
    %16 = vsyncpa %s15, 0
    %17 = vsyncpa [#allocation9], 0
    %18 = vsyncpa [#allocation7], 0
    %s19 = scalar_lea.sflag [#allocation7], 1
    %20 = vsyncpa %s19, 0
    loop: start=0, step=1, limit=4
    $region2: #{tpu_custom_call.1} parent=1 // loop_pre_header
      _
    $region3: #{tpu_custom_call.1} parent=1 // loop_header
      %s22 = sphi 0, %s26
      %p23 = scmp.ge.s32.totalorder %s22, 4
      %s32 = sphi 0, %s34
      %s35 = sphi 0, %s32
      %s36 = sphi 0, %s35
      %s52 = sphi 0, %s36
      %s56 = sphi 0, %s56
      %s58 = sphi 0, %s56
      %s59 = sphi 0, %s58
      %s73 = sphi 0, %s59
      %s77 = sphi 0, %s77
      %s79 = sphi 0, %s77
      %s80 = sphi 0, %s79
      %s94 = sphi 0, %s80
      %s98 = sphi 0, %s98
      %s100 = sphi 0, %s98
      %s101 = sphi 0, %s100
      %s115 = sphi 0, %s101
      %s119 = sphi 0, %s119
      %s121 = sphi 0, %s119
      %s122 = sphi 0, %s121
      %s136 = sphi 0, %s122
      %s140 = sphi 0, %s140
      %s142 = sphi 0, %s140
      %s143 = sphi 0, %s142
      %s157 = sphi 0, %s143
      %s161 = sphi 0, %s161
      %s163 = sphi 0, %s161
      %s164 = sphi 0, %s163
      %s178 = sphi 0, %s164
      %s182 = sphi 0, %s182
      %s184 = sphi 0, %s182
      %s185 = sphi 0, %s184
      %s199 = sphi 0, %s185
      %s205 = sphi 0, %s207
      %s208 = sphi 0, %s205
      %s209 = sphi 0, %s208
      %s225 = sphi 0, %s209
    $region4: #{tpu_custom_call.1} parent=1 // loop_header_branch
      %25 = sbr.rel (%p23) target = $region8
    $region5: #{tpu_custom_call.1} parent=1 // loop_body
      %s27 = ssub.s32 %s22, 1
      %s28 = ssub.s32 %s22, 2
      %s29 = sadd.s32 %s22, 1
      %s30 = ssub.s32 %s22, %s29
      %p31 = scmp.eq.s32.totalorder %s30, 0
      %s33 = sadd.s32 %s32, 1
      %s34 = scalar_select %p31, %s32, %s33
      %p37 = pneg %p31
      %p38 = scmp.eq.s32.totalorder %s22, 1
      %p39 = por %p37, %p38
      %p40 = scmp.ne.s32.totalorder %s32, %s35
      %p41 = scmp.eq.s32.totalorder %s22, 0
      %p42 = por %p40, %p41
      %p43 = scmp.ne.s32.totalorder %s32, %s35
      %p44 = scmp.eq.s32.totalorder %s27, 1
      %p45 = por %p43, %p44
      %p46 = scmp.ne.s32.totalorder %s35, %s36
      %p47 = scmp.eq.s32.totalorder %s27, 0
      %p48 = por %p46, %p47
      %p49 = scmp.ne.s32.totalorder %s35, %s36
      %p50 = scmp.eq.s32.totalorder %s28, 1
      %p51 = por %p49, %p50
      %p53 = scmp.ne.s32.totalorder %s36, %s52
      %p54 = scmp.eq.s32.totalorder %s28, 0
      %p55 = por %p53, %p54
      %s57 = sadd.s32 %s56, 1
      %p60 = scmp.eq.s32.totalorder %s22, 1
      %p61 = scmp.ne.s32.totalorder %s56, %s58
      %p62 = scmp.eq.s32.totalorder %s22, 0
      %p63 = por %p61, %p62
      %p64 = scmp.ne.s32.totalorder %s56, %s58
      %p65 = scmp.eq.s32.totalorder %s27, 1
      %p66 = por %p64, %p65
      %p67 = scmp.ne.s32.totalorder %s58, %s59
      %p68 = scmp.eq.s32.totalorder %s27, 0
      %p69 = por %p67, %p68
      %p70 = scmp.ne.s32.totalorder %s58, %s59
      %p71 = scmp.eq.s32.totalorder %s28, 1
      %p72 = por %p70, %p71
      %p74 = scmp.ne.s32.totalorder %s59, %s73
      %p75 = scmp.eq.s32.totalorder %s28, 0
      %p76 = por %p74, %p75
      %s78 = sadd.s32 %s77, 1
      %p81 = scmp.eq.s32.totalorder %s22, 1
      %p82 = scmp.ne.s32.totalorder %s77, %s79
      %p83 = scmp.eq.s32.totalorder %s22, 0
      %p84 = por %p82, %p83
      %p85 = scmp.ne.s32.totalorder %s77, %s79
      %p86 = scmp.eq.s32.totalorder %s27, 1
      %p87 = por %p85, %p86
      %p88 = scmp.ne.s32.totalorder %s79, %s80
      %p89 = scmp.eq.s32.totalorder %s27, 0
      %p90 = por %p88, %p89
      %p91 = scmp.ne.s32.totalorder %s79, %s80
      %p92 = scmp.eq.s32.totalorder %s28, 1
      %p93 = por %p91, %p92
      %p95 = scmp.ne.s32.totalorder %s80, %s94
      %p96 = scmp.eq.s32.totalorder %s28, 0
      %p97 = por %p95, %p96
      %s99 = sadd.s32 %s98, 1
      %p102 = scmp.eq.s32.totalorder %s22, 1
      %p103 = scmp.ne.s32.totalorder %s98, %s100
      %p104 = scmp.eq.s32.totalorder %s22, 0
      %p105 = por %p103, %p104
      %p106 = scmp.ne.s32.totalorder %s98, %s100
      %p107 = scmp.eq.s32.totalorder %s27, 1
      %p108 = por %p106, %p107
      %p109 = scmp.ne.s32.totalorder %s100, %s101
      %p110 = scmp.eq.s32.totalorder %s27, 0
      %p111 = por %p109, %p110
      %p112 = scmp.ne.s32.totalorder %s100, %s101
      %p113 = scmp.eq.s32.totalorder %s28, 1
      %p114 = por %p112, %p113
      %p116 = scmp.ne.s32.totalorder %s101, %s115
      %p117 = scmp.eq.s32.totalorder %s28, 0
      %p118 = por %p116, %p117
      %s120 = sadd.s32 %s119, 1
      %p123 = scmp.eq.s32.totalorder %s22, 1
      %p124 = scmp.ne.s32.totalorder %s119, %s121
      %p125 = scmp.eq.s32.totalorder %s22, 0
      %p126 = por %p124, %p125
      %p127 = scmp.ne.s32.totalorder %s119, %s121
      %p128 = scmp.eq.s32.totalorder %s27, 1
      %p129 = por %p127, %p128
      %p130 = scmp.ne.s32.totalorder %s121, %s122
      %p131 = scmp.eq.s32.totalorder %s27, 0
      %p132 = por %p130, %p131
      %p133 = scmp.ne.s32.totalorder %s121, %s122
      %p134 = scmp.eq.s32.totalorder %s28, 1
      %p135 = por %p133, %p134
      %p137 = scmp.ne.s32.totalorder %s122, %s136
      %p138 = scmp.eq.s32.totalorder %s28, 0
      %p139 = por %p137, %p138
      %s141 = sadd.s32 %s140, 1
      %p144 = scmp.eq.s32.totalorder %s22, 1
      %p145 = scmp.ne.s32.totalorder %s140, %s142
      %p146 = scmp.eq.s32.totalorder %s22, 0
      %p147 = por %p145, %p146
      %p148 = scmp.ne.s32.totalorder %s140, %s142
      %p149 = scmp.eq.s32.totalorder %s27, 1
      %p150 = por %p148, %p149
      %p151 = scmp.ne.s32.totalorder %s142, %s143
      %p152 = scmp.eq.s32.totalorder %s27, 0
      %p153 = por %p151, %p152
      %p154 = scmp.ne.s32.totalorder %s142, %s143
      %p155 = scmp.eq.s32.totalorder %s28, 1
      %p156 = por %p154, %p155
      %p158 = scmp.ne.s32.totalorder %s143, %s157
      %p159 = scmp.eq.s32.totalorder %s28, 0
      %p160 = por %p158, %p159
      %s162 = sadd.s32 %s161, 1
      %p165 = scmp.eq.s32.totalorder %s22, 1
      %p166 = scmp.ne.s32.totalorder %s161, %s163
      %p167 = scmp.eq.s32.totalorder %s22, 0
      %p168 = por %p166, %p167
      %p169 = scmp.ne.s32.totalorder %s161, %s163
      %p170 = scmp.eq.s32.totalorder %s27, 1
      %p171 = por %p169, %p170
      %p172 = scmp.ne.s32.totalorder %s163, %s164
      %p173 = scmp.eq.s32.totalorder %s27, 0
      %p174 = por %p172, %p173
      %p175 = scmp.ne.s32.totalorder %s163, %s164
      %p176 = scmp.eq.s32.totalorder %s28, 1
      %p177 = por %p175, %p176
      %p179 = scmp.ne.s32.totalorder %s164, %s178
      %p180 = scmp.eq.s32.totalorder %s28, 0
      %p181 = por %p179, %p180
      %s183 = sadd.s32 %s182, 1
      %p186 = scmp.eq.s32.totalorder %s22, 1
      %p187 = scmp.ne.s32.totalorder %s182, %s184
      %p188 = scmp.eq.s32.totalorder %s22, 0
      %p189 = por %p187, %p188
      %p190 = scmp.ne.s32.totalorder %s182, %s184
      %p191 = scmp.eq.s32.totalorder %s27, 1
      %p192 = por %p190, %p191
      %p193 = scmp.ne.s32.totalorder %s184, %s185
      %p194 = scmp.eq.s32.totalorder %s27, 0
      %p195 = por %p193, %p194
      %p196 = scmp.ne.s32.totalorder %s184, %s185
      %p197 = scmp.eq.s32.totalorder %s28, 1
      %p198 = por %p196, %p197
      %p200 = scmp.ne.s32.totalorder %s185, %s199
      %p201 = scmp.eq.s32.totalorder %s28, 0
      %p202 = por %p200, %p201
      %s203 = ssub.s32 %s22, %s29
      %p204 = scmp.eq.s32.totalorder %s203, 0
      %s206 = sadd.s32 %s205, 1
      %s207 = scalar_select %p204, %s205, %s206
      %p210 = pneg %p204
      %p211 = scmp.eq.s32.totalorder %s22, 1
      %p212 = por %p210, %p211
      %p213 = scmp.ne.s32.totalorder %s205, %s208
      %p214 = scmp.eq.s32.totalorder %s22, 0
      %p215 = por %p213, %p214
      %p216 = scmp.ne.s32.totalorder %s205, %s208
      %p217 = scmp.eq.s32.totalorder %s27, 1
      %p218 = por %p216, %p217
      %p219 = scmp.ne.s32.totalorder %s208, %s209
      %p220 = scmp.eq.s32.totalorder %s27, 0
      %p221 = por %p219, %p220
      %p222 = scmp.ne.s32.totalorder %s208, %s209
      %p223 = scmp.eq.s32.totalorder %s28, 1
      %p224 = por %p222, %p223
      %p226 = scmp.ne.s32.totalorder %s209, %s225
      %p227 = scmp.eq.s32.totalorder %s28, 0
      %p228 = por %p226, %p227
      %p229 = scmp.le.s32.totalorder 1, %s22
      %p230 = scmp.lt.s32.totalorder %s22, 3
      %p231 = pnand %p229, %p230
      %p232 = pneg %p231
      // Predicated region
      $region9: #{tpu_custom_call.1} parent=5 // pred_check
        _
      $region10: #{tpu_custom_call.1} parent=5 // pred_check_branch
        %234 = sbr.rel (%p231) target = $region12
      $region11: #{tpu_custom_call.1} parent=5 // pred_region
        %s235 = ssub.s32 %s22, 1
        // Predicated region
        $region13: #{tpu_custom_call.1} parent=11 // pred_check
          %p236 = pneg %p69
        $region14: #{tpu_custom_call.1} parent=11 // pred_check_branch
          %238 = sbr.rel (%p236) target = $region16
        $region15: #{tpu_custom_call.1} parent=11 // pred_region
          _
        $region16: #{tpu_custom_call.1} parent=11 // pred_fallthru
          _
        // Predicated region
        $region17: #{tpu_custom_call.1} parent=11 // pred_check
          %p239 = pneg %p90
        $region18: #{tpu_custom_call.1} parent=11 // pred_check_branch
          %241 = sbr.rel (%p239) target = $region20
        $region19: #{tpu_custom_call.1} parent=11 // pred_region
          %243 = vsyncadd [#allocation9], 0
          %s245 = sshll.u32 %s2, 4
          %s246 = int_to_ptr.hbm [resolvable:$true] %s245
          %s247 = sshll.u32 [#allocation8], 4
          %s248 = int_to_ptr.vmem [resolvable:$true] %s247
          %250 = dma.hbm_to_vmem [thread:$0]  %s246, 16, %s248, [#allocation9]
        $region20: #{tpu_custom_call.1} parent=11 // pred_fallthru
          _
        // Predicated region
        $region21: #{tpu_custom_call.1} parent=11 // pred_check
          %p251 = pneg %p111
        $region22: #{tpu_custom_call.1} parent=11 // pred_check_branch
          %253 = sbr.rel (%p251) target = $region24
        $region23: #{tpu_custom_call.1} parent=11 // pred_region
          _
        $region24: #{tpu_custom_call.1} parent=11 // pred_fallthru
          _
        // Predicated region
        $region25: #{tpu_custom_call.1} parent=11 // pred_check
          %p254 = pneg %p132
        $region26: #{tpu_custom_call.1} parent=11 // pred_check_branch
          %256 = sbr.rel (%p254) target = $region28
        $region27: #{tpu_custom_call.1} parent=11 // pred_region
          _
        $region28: #{tpu_custom_call.1} parent=11 // pred_fallthru
          _
        // Predicated region
        $region29: #{tpu_custom_call.1} parent=11 // pred_check
          %p257 = pneg %p153
        $region30: #{tpu_custom_call.1} parent=11 // pred_check_branch
          %259 = sbr.rel (%p257) target = $region32
        $region31: #{tpu_custom_call.1} parent=11 // pred_region
          _
        $region32: #{tpu_custom_call.1} parent=11 // pred_fallthru
          _
        // Predicated region
        $region33: #{tpu_custom_call.1} parent=11 // pred_check
          %p260 = pneg %p174
        $region34: #{tpu_custom_call.1} parent=11 // pred_check_branch
          %262 = sbr.rel (%p260) target = $region36
        $region35: #{tpu_custom_call.1} parent=11 // pred_region
          _
        $region36: #{tpu_custom_call.1} parent=11 // pred_fallthru
          _
        // Predicated region
        $region37: #{tpu_custom_call.1} parent=11 // pred_check
          %p263 = pneg %p195
        $region38: #{tpu_custom_call.1} parent=11 // pred_check_branch
          %265 = sbr.rel (%p263) target = $region40
        $region39: #{tpu_custom_call.1} parent=11 // pred_region
          _
        $region40: #{tpu_custom_call.1} parent=11 // pred_fallthru
          _
      $region12: #{tpu_custom_call.1} parent=5 // pred_fallthru
        _
      %p266 = scmp.lt.s32.totalorder %s22, 2
      // Predicated region
      $region41: #{tpu_custom_call.1} parent=5 // pred_check
        %p267 = pneg %p266
      $region42: #{tpu_custom_call.1} parent=5 // pred_check_branch
        %269 = sbr.rel (%p267) target = $region44
      $region43: #{tpu_custom_call.1} parent=5 // pred_region
        // Predicated region
        $region45: #{tpu_custom_call.1} parent=43 // pred_check
          %p270 = pneg %p42
        $region46: #{tpu_custom_call.1} parent=43 // pred_check_branch
          %272 = sbr.rel (%p270) target = $region48
        $region47: #{tpu_custom_call.1} parent=43 // pred_region
          %s273 = sand.u32 %s32, 1
          %s274 = scalar_lea.sflag [#allocation6], %s273
          %s275 = sand.u32 %s32, 1
          %s276 = smul.addr %s275, 64
          %s277 = scalar_lea.vmem [#allocation5], %s276
          %279 = vsyncadd %s274, 0
          %s280 = smul.addr %s22, 8
          %s281 = smul.addr %s280, 8
          %s282 = scalar_lea.hbm %s0, %s281
          %s283 = sshll.u32 %s282, 4
          %s284 = int_to_ptr.hbm [resolvable:$true] %s283
          %s285 = sshll.u32 %s277, 4
          %s286 = int_to_ptr.vmem [resolvable:$true] %s285
          %291 = dma.hbm_to_vmem [thread:$0]  %s284, 1024, %s286, %s274, 256, 256, 16
        $region48: #{tpu_custom_call.1} parent=43 // pred_fallthru
          _
      $region44: #{tpu_custom_call.1} parent=5 // pred_fallthru
        _
      %p292 = scmp.le.s32.totalorder 1, %s22
      %p293 = scmp.lt.s32.totalorder %s22, 3
      %p294 = pnand %p292, %p293
      %p295 = pneg %p294
      // Predicated region
      $region49: #{tpu_custom_call.1} parent=5 // pred_check
        _
      $region50: #{tpu_custom_call.1} parent=5 // pred_check_branch
        %297 = sbr.rel (%p294) target = $region52
      $region51: #{tpu_custom_call.1} parent=5 // pred_region
        %s298 = ssub.s32 %s22, 1
        %s299 = sand.u32 %s35, 1
        %s300 = scalar_lea.sflag [#allocation6], %s299
        %s301 = sand.u32 %s35, 1
        %s302 = smul.addr %s301, 64
        %s303 = scalar_lea.vmem [#allocation5], %s302
        // Predicated region
        $region53: #{tpu_custom_call.1} parent=51 // pred_check
          %p304 = pneg %p48
        $region54: #{tpu_custom_call.1} parent=51 // pred_check_branch
          %306 = sbr.rel (%p304) target = $region56
        $region55: #{tpu_custom_call.1} parent=51 // pred_region
          %308 = dma.done %s300, 1024
        $region56: #{tpu_custom_call.1} parent=51 // pred_fallthru
          _
        // Predicated region
        $region57: #{tpu_custom_call.1} parent=51 // pred_check
          %p309 = pneg %p90
        $region58: #{tpu_custom_call.1} parent=51 // pred_check_branch
          %311 = sbr.rel (%p309) target = $region60
        $region59: #{tpu_custom_call.1} parent=51 // pred_region
          %313 = dma.done [#allocation9], 16
        $region60: #{tpu_custom_call.1} parent=51 // pred_fallthru
          _
        %s314 = sand.u32 %s35, 1
        %s315 = scalar_lea.sflag [#allocation6], %s314
        %s316 = sand.u32 %s35, 1
        %s317 = smul.addr %s316, 64
        %s318 = scalar_lea.vmem [#allocation5], %s317
        %p319 = pneg %p48
        %p320 = pneg %p45
        %p321 = pneg %p69
        %p322 = pneg %p66
        %p323 = pneg %p90
        %p324 = pneg %p87
        %p325 = pneg %p111
        %p326 = pneg %p108
        %p327 = pneg %p132
        %p328 = pneg %p129
        %p329 = pneg %p153
        %p330 = pneg %p150
        %p331 = pneg %p174
        %p332 = pneg %p171
        %p333 = pneg %p195
        %p334 = pneg %p192
        %p335 = pneg %p221
        %p336 = pneg %p218
        %s337 = sand.u32 %s208, 1
        %s338 = scalar_lea.sflag [#allocation7], %s337
        %s339 = sand.u32 %s208, 1
        %s340 = smul.addr %s339, 64
        %s341 = scalar_lea.vmem [#allocation10], %s340
        %v342 = vld [vmem:[%s303] sm:$0xff]
        %v343 = vld [vmem:[%s303 + $0x8] sm:$0xff]
        %v344 = vld [vmem:[%s303 + $0x10] sm:$0xff]
        %v345 = vld [vmem:[%s303 + $0x18] sm:$0xff]
        %v346 = vld [vmem:[%s303 + $0x20] sm:$0xff]
        %v347 = vld [vmem:[%s303 + $0x28] sm:$0xff]
        %v348 = vld [vmem:[%s303 + $0x30] sm:$0xff]
        %v349 = vld [vmem:[%s303 + $0x38] sm:$0xff]
        %v350 = vadd.f32 %v342, %v343
        %351 = vadd.xlane.f32.xlu0 %v350
        %v352 = vpop.xlane.xlu0 %351
        %v353 = vadd.f32 %v344, %v345
        %354 = vadd.xlane.f32.xlu0 %v353
        %v355 = vpop.xlane.xlu0 %354
        %v356 = vadd.f32 %v346, %v347
        %357 = vadd.xlane.f32.xlu0 %v356
        %v358 = vpop.xlane.xlu0 %357
        %v359 = vadd.f32 %v348, %v349
        %360 = vadd.xlane.f32.xlu0 %v359
        %v361 = vpop.xlane.xlu0 %360
        %v362 = vrcp.pop 256.0
        %v363 = vmul.f32 256.0, %v362
        %v364 = vsub.f32 1.0, %v363
        %v365 = vmul.f32 %v362, %v364
        %v366 = vadd.f32 %v362, %v365
        %vm367 = vweird.f32 %v362
        %v368 = vsel %vm367, %v362, %v366
        %v369 = vmul.f32 %v352, %v368
        %v370 = vmul.f32 %v355, %v368
        %v371 = vmul.f32 %v358, %v368
        %v372 = vmul.f32 %v361, %v368
        %v373 = vmax.f32 %v342, %v343
        %374 = vmax.xlane.f32.xlu0 %v373
        %v375 = vpop.xlane.xlu0 %374
        %v376 = vmax.f32 %v344, %v345
        %377 = vmax.xlane.f32.xlu0 %v376
        %v378 = vpop.xlane.xlu0 %377
        %v379 = vmax.f32 %v346, %v347
        %380 = vmax.xlane.f32.xlu0 %v379
        %v381 = vpop.xlane.xlu0 %380
        %v382 = vmax.f32 %v348, %v349
        %383 = vmax.xlane.f32.xlu0 %v382
        %v384 = vpop.xlane.xlu0 %383
        %v389 = vlaneseq
        %v390 = vand.u32 %v389, 127
        %v391 = vperm.slane %v369, %v390
        %v392 = vadd.s32 %v390, 4294967288
        %v393 = vperm.slane %v370, %v392
        %vm394 = vcmask 130112
        %v395 = vsel %vm394, %v393, %v391
        %v396 = vadd.s32 %v390, 4294967280
        %v397 = vperm.slane %v371, %v396
        %vm398 = vcmask 195712
        %v399 = vsel %vm398, %v397, %v395
        %v400 = vadd.s32 %v390, 4294967272
        %v401 = vperm.slane %v372, %v400
        %vm402 = vcmask 261312
        %v403 = vsel %vm402, %v401, %v399
        %v409 = vperm.slane %v375, %v390
        %v410 = vperm.slane %v378, %v392
        %v411 = vsel %vm394, %v410, %v409
        %v412 = vperm.slane %v381, %v396
        %v413 = vsel %vm398, %v412, %v411
        %v414 = vperm.slane %v384, %v400
        %v415 = vsel %vm402, %v414, %v413
        %vm417 = vcmask 1040384
        %v418 = vsel %vm417, %v403, %v415
        %v419 = vld [vmem:[%s1] sm:$0xff]
        %v420 = vld [vmem:[%s1 + $0x8] sm:$0xff]
        %v421 = vld [vmem:[%s1 + $0x10] sm:$0xff]
        %v422 = vld [vmem:[%s1 + $0x18] sm:$0xff]
        %v423 = vld [vmem:[#allocation8] sm:$0x1]
        %v425 = vperm.slane %v423, 0
        %vm427 = vcmask 261120
        %v429 = vsel %vm427, %v418, 0
        %431 = vmatpush.msra.mxu0 0.0
        %432 = vmatpush.msra.mxu0 0.0
        %433 = vmatpush.msra.mxu0 0.0
        %434 = vmatpush.msra.mxu0 0.0
        %435 = vmatpush.msra.mxu0 0.0
        %436 = vmatpush.msra.mxu0 0.0
        %437 = vmatpush.msra.mxu0 0.0
        %438 = vmatpush.msra.mxu0 0.0
        %439 = vmatpush.msra.mxu0 0.0
        %440 = vmatpush.msra.mxu0 0.0
        %441 = vmatpush.msra.mxu0 0.0
        %442 = vmatpush.msra.mxu0 0.0
        %443 = vmatpush.msra.mxu0 %v422
        %444 = vmatpush.msra.mxu0 %v421
        %445 = vmatpush.msra.mxu0 %v420
        %446 = vmatpush.msra.mxu0 %v419
        %447 = vmatmul.f32.gmra.mxu0 %v429
        %v448 = vpop.f32.mrf.mxu0
        %v449 = vadd.f32 %v425, %v448
        %450 = vdwg.mxu0
        %v451 = vmax.f32 %v449, 0.0
        %v452 = vld [vmem:[%s3] sm:$0x3]
        %v453 = vld [vmem:[%s4] sm:$0x1]
        %v455 = vperm.slane %v453, 0
        %vm457 = vcmask 15360
        %v459 = vsel %vm457, %v451, 0
        %vm461 = vcmask 1041408
        %v463 = vsel %vm461, %v452, 0
        %465 = vmatpush.msra.mxu0 0.0
        %466 = vmatpush.msra.mxu0 0.0
        %467 = vmatpush.msra.mxu0 0.0
        %468 = vmatpush.msra.mxu0 0.0
        %469 = vmatpush.msra.mxu0 0.0
        %470 = vmatpush.msra.mxu0 0.0
        %471 = vmatpush.msra.mxu0 0.0
        %472 = vmatpush.msra.mxu0 0.0
        %473 = vmatpush.msra.mxu0 0.0
        %474 = vmatpush.msra.mxu0 0.0
        %475 = vmatpush.msra.mxu0 0.0
        %476 = vmatpush.msra.mxu0 0.0
        %477 = vmatpush.msra.mxu0 0.0
        %478 = vmatpush.msra.mxu0 0.0
        %479 = vmatpush.msra.mxu0 0.0
        %480 = vmatpush.msra.mxu0 %v463
        %481 = vmatmul.f32.gmra.mxu0 %v459
        %v482 = vpop.f32.mrf.mxu0
        %v483 = vadd.f32 %v455, %v482
        %484 = vdwg.mxu0
        %v486 = vrot.slane %v483, 1
        %v488 = vadd.f32 %v483, %v486
        %v489 = vxor.u32 %v488, 2147483648
        %v490 = vmul.f32 %v489, 1.442695
        %v491 = vpow.pop %v490
        %v492 = vadd.f32 %v491, 1.0
        %v493 = vrcp.pop %v492
        %v494 = vmul.f32 %v492, %v493
        %v495 = vsub.f32 1.0, %v494
        %v496 = vmul.f32 %v493, %v495
        %v497 = vadd.f32 %v493, %v496
        %vm498 = vweird.f32 %v492
        %vm499 = vweird.f32 %v493
        %vm500 = vmor %vm498, %vm499
        %v501 = vsel %vm500, %v493, %v497
        %v502 = vand.u32 2147483647, %v492
        %vm503 = vcmp.eq.f32.partialorder %v502, 8.507059e+37
        %v504 = vand.u32 %v492, 2147483648
        %v505 = vor.u32 1.1754944e-38, %v504
        %v506 = vsel %vm503, %v505, %v501
        %v507 = vmul.f32 1.0, %v506
        %v508 = vperm.slane %v507, 0
        %v509 = vlaneseq
        %v510 = vshrl.u32 %v509, 7
        %512 = vset.pattern.permute.xlu0 %v510
        %513 = vperm.xlu0 %512, %v508
        %v514 = vpop.permute.xlu0 %513
        %v515 = vlaneseq
        %v516 = vshrl.u32 %v515, 7
        %v517 = vadd.s32 %v516, 8
        %518 = vset.pattern.permute.xlu0 %v517
        %519 = vperm.xlu0 %518, %v508
        %v520 = vpop.permute.xlu0 %519
        %v521 = vlaneseq
        %v522 = vshrl.u32 %v521, 7
        %v523 = vadd.s32 %v522, 16
        %524 = vset.pattern.permute.xlu0 %v523
        %525 = vperm.xlu0 %524, %v508
        %v526 = vpop.permute.xlu0 %525
        %v527 = vlaneseq
        %v528 = vshrl.u32 %v527, 7
        %v529 = vadd.s32 %v528, 24
        %530 = vset.pattern.permute.xlu0 %v529
        %531 = vperm.xlu0 %530, %v508
        %v532 = vpop.permute.xlu0 %531
        %v533 = vmul.f32 %v342, %v514
        %v534 = vmul.f32 %v343, %v514
        %v535 = vmul.f32 %v344, %v520
        %v536 = vmul.f32 %v345, %v520
        %v537 = vmul.f32 %v346, %v526
        %v538 = vmul.f32 %v347, %v526
        %v539 = vmul.f32 %v348, %v532
        %v540 = vmul.f32 %v349, %v532
        %541 = vst [vmem:[%s341] sm:$0xff] %v533
        %542 = vst [vmem:[%s341 + $0x8] sm:$0xff] %v534
        %543 = vst [vmem:[%s341 + $0x10] sm:$0xff] %v535
        %544 = vst [vmem:[%s341 + $0x18] sm:$0xff] %v536
        %545 = vst [vmem:[%s341 + $0x20] sm:$0xff] %v537
        %546 = vst [vmem:[%s341 + $0x28] sm:$0xff] %v538
        %547 = vst [vmem:[%s341 + $0x30] sm:$0xff] %v539
        %548 = vst [vmem:[%s341 + $0x38] sm:$0xff] %v540
        %v549 = vld [vmem:[%s341] sm:$0xff]
        %v550 = vld [vmem:[%s341 + $0x8] sm:$0xff]
        %v551 = vld [vmem:[%s341 + $0x10] sm:$0xff]
        %v552 = vld [vmem:[%s341 + $0x18] sm:$0xff]
        %v553 = vld [vmem:[%s341 + $0x20] sm:$0xff]
        %v554 = vld [vmem:[%s341 + $0x28] sm:$0xff]
        %v555 = vld [vmem:[%s341 + $0x30] sm:$0xff]
        %v556 = vld [vmem:[%s341 + $0x38] sm:$0xff]
        %v557 = vadd.f32 %v549, %v551
        %v558 = vadd.f32 %v557, %v553
        %v559 = vadd.f32 %v558, %v555
        %v560 = vrot.slane %v559, 4
        %v561 = vadd.f32 %v559, %v560
        %v562 = vrot.slane %v561, 2
        %v563 = vadd.f32 %v561, %v562
        %v564 = vrot.slane %v563, 1
        %v565 = vadd.f32 %v563, %v564
        %v566 = vadd.f32 %v550, %v552
        %v567 = vadd.f32 %v566, %v554
        %v568 = vadd.f32 %v567, %v556
        %v569 = vrot.slane %v568, 4
        %v570 = vadd.f32 %v568, %v569
        %v571 = vrot.slane %v570, 2
        %v572 = vadd.f32 %v570, %v571
        %v573 = vrot.slane %v572, 1
        %v574 = vadd.f32 %v572, %v573
        %v575 = vrcp.pop 32.0
        %v576 = vmul.f32 32.0, %v575
        %v577 = vsub.f32 1.0, %v576
        %v578 = vmul.f32 %v575, %v577
        %v579 = vadd.f32 %v575, %v578
        %vm580 = vweird.f32 %v575
        %v581 = vsel %vm580, %v575, %v579
        %v582 = vmul.f32 %v565, %v581
        %v583 = vmul.f32 %v574, %v581
        %v586 = vrot.slane %v583, 7
        %v587 = vsel %vm417, %v582, %v586
        %v589 = vlaneseq
        %vm590 = vcmp.ge.s32.totalorder %v589, 0
        %vm591 = vcmp.lt.s32.totalorder %v589, 256
        %vm592 = vmand %vm590, %vm591
        %593 = vst.msk [vmem:[#allocation2] ss:$2 sm:$0x3] %vm592, %v587
        %v594 = vmax.f32 %v549, %v553
        %v595 = vmax.f32 %v551, %v555
        %v596 = vmax.f32 %v594, %v595
        %v597 = vrot.slane %v596, 4
        %v598 = vmax.f32 %v596, %v597
        %v599 = vrot.slane %v598, 2
        %v600 = vmax.f32 %v598, %v599
        %v601 = vrot.slane %v600, 1
        %v602 = vmax.f32 %v600, %v601
        %v603 = vmax.f32 %v550, %v554
        %v604 = vmax.f32 %v552, %v556
        %v605 = vmax.f32 %v603, %v604
        %v606 = vrot.slane %v605, 4
        %v607 = vmax.f32 %v605, %v606
        %v608 = vrot.slane %v607, 2
        %v609 = vmax.f32 %v607, %v608
        %v610 = vrot.slane %v609, 1
        %v611 = vmax.f32 %v609, %v610
        %v614 = vrot.slane %v611, 7
        %v615 = vsel %vm417, %v602, %v614
        %s617 = scalar_lea.vmem [#allocation2], 1
        %618 = vst.msk [vmem:[%s617] ss:$2 sm:$0x3] %vm592, %v615
        %v619 = vld [vmem:[#allocation2] sm:$0xf]
        %621 = vst [vmem:[#allocation1] ss:$4 sm:$0xff] %v619
        %v622 = vld.sshfl [vmem:[#allocation1] sm:$0xff pattern:$0x73625140]
        %v623 = vld.sshfl [vmem:[#allocation1 + $0x8] sm:$0xff pattern:$0x73625140]
        %626 = vrot.lane.b32.xlu0 %v622, 3
        %v627 = vpop.permute.xlu0 %626
        %628 = vrot.lane.b32.xlu0 %v623, 3
        %v629 = vpop.permute.xlu0 %628
        %vm630 = vcmp.lt.s32.totalorder %v390, 3
        %v631 = vsel %vm630, %v627, %v629
        %v632 = vsel %vm630, %v629, %v627
        %v633 = vld [vmem:[%s6] ss:$8 sm:$0x3]
        %v635 = vperm.slane %v633, 0
        %v636 = vperm.slane %v633, 1
        %v639 = vmul.f32 %v632, %v635
        %v640 = vmul.f32 %v631, %v636
        %641 = vst [vmem:[#allocation1] ss:$4 sm:$0xff] %v619
        %v642 = vld.sshfl [vmem:[#allocation1] sm:$0xff pattern:$0x73625140]
        %v643 = vld.sshfl [vmem:[#allocation1 + $0x8] sm:$0xff pattern:$0x73625140]
        %646 = vrot.lane.b32.xlu0 %v642, 2
        %v647 = vpop.permute.xlu0 %646
        %648 = vrot.lane.b32.xlu0 %v643, 2
        %v649 = vpop.permute.xlu0 %648
        %vm650 = vcmp.lt.s32.totalorder %v390, 2
        %v651 = vsel %vm650, %v647, %v649
        %v652 = vsel %vm650, %v649, %v647
        %s653 = scalar_lea.vmem %s6, 1
        %v654 = vld [vmem:[%s653] ss:$8 sm:$0x3]
        %v656 = vperm.slane %v654, 0
        %v657 = vperm.slane %v654, 1
        %v660 = vmul.f32 %v652, %v656
        %v661 = vmul.f32 %v651, %v657
        %662 = vst [vmem:[#allocation1] ss:$4 sm:$0xff] %v619
        %v663 = vld.sshfl [vmem:[#allocation1] sm:$0xff pattern:$0x73625140]
        %v664 = vld.sshfl [vmem:[#allocation1 + $0x8] sm:$0xff pattern:$0x73625140]
        %667 = vrot.lane.b32.xlu0 %v663, 1
        %v668 = vpop.permute.xlu0 %667
        %669 = vrot.lane.b32.xlu0 %v664, 1
        %v670 = vpop.permute.xlu0 %669
        %vm671 = vcmp.lt.s32.totalorder %v390, 1
        %v672 = vsel %vm671, %v668, %v670
        %v673 = vsel %vm671, %v670, %v668
        %s674 = scalar_lea.vmem %s6, 2
        %v675 = vld [vmem:[%s674] ss:$8 sm:$0x3]
        %v677 = vperm.slane %v675, 0
        %v678 = vperm.slane %v675, 1
        %v681 = vmul.f32 %v673, %v677
        %v682 = vmul.f32 %v672, %v678
        %s683 = scalar_lea.vmem %s6, 3
        %v684 = vld [vmem:[%s683] ss:$8 sm:$0x3]
        %v686 = vperm.slane %v684, 0
        %v687 = vperm.slane %v684, 1
        %v688 = vrot.slane %v687, 6
        %v689 = vsel %vm461, %v686, %v688
        %v691 = vmul.f32 %v619, %v689
        %692 = vst [vmem:[#allocation1] ss:$4 sm:$0xff] %v619
        %v693 = vld.sshfl [vmem:[#allocation1] sm:$0xff pattern:$0x73625140]
        %v694 = vld.sshfl [vmem:[#allocation1 + $0x8] sm:$0xff pattern:$0x73625140]
        %697 = vrot.lane.b32.xlu0 %v693, 127
        %v698 = vpop.permute.xlu0 %697
        %699 = vrot.lane.b32.xlu0 %v694, 127
        %v700 = vpop.permute.xlu0 %699
        %vm701 = vcmp.lt.s32.totalorder %v390, 127
        %v702 = vsel %vm701, %v698, %v700
        %v703 = vsel %vm701, %v700, %v698
        %s704 = scalar_lea.vmem %s6, 4
        %v705 = vld [vmem:[%s704] ss:$8 sm:$0x3]
        %v707 = vperm.slane %v705, 0
        %v708 = vperm.slane %v705, 1
        %v711 = vmul.f32 %v702, %v707
        %v712 = vmul.f32 %v703, %v708
        %713 = vst [vmem:[#allocation1] ss:$4 sm:$0xff] %v619
        %v714 = vld.sshfl [vmem:[#allocation1] sm:$0xff pattern:$0x73625140]
        %v715 = vld.sshfl [vmem:[#allocation1 + $0x8] sm:$0xff pattern:$0x73625140]
        %718 = vrot.lane.b32.xlu0 %v714, 126
        %v719 = vpop.permute.xlu0 %718
        %720 = vrot.lane.b32.xlu0 %v715, 126
        %v721 = vpop.permute.xlu0 %720
        %vm722 = vcmp.lt.s32.totalorder %v390, 126
        %v723 = vsel %vm722, %v719, %v721
        %v724 = vsel %vm722, %v721, %v719
        %s725 = scalar_lea.vmem %s6, 5
        %v726 = vld [vmem:[%s725] ss:$8 sm:$0x3]
        %v728 = vperm.slane %v726, 0
        %v729 = vperm.slane %v726, 1
        %v732 = vmul.f32 %v723, %v728
        %v733 = vmul.f32 %v724, %v729
        %734 = vst [vmem:[#allocation1] ss:$4 sm:$0xff] %v619
        %v735 = vld.sshfl [vmem:[#allocation1] sm:$0xff pattern:$0x73625140]
        %v736 = vld.sshfl [vmem:[#allocation1 + $0x8] sm:$0xff pattern:$0x73625140]
        %739 = vrot.lane.b32.xlu0 %v735, 125
        %v740 = vpop.permute.xlu0 %739
        %741 = vrot.lane.b32.xlu0 %v736, 125
        %v742 = vpop.permute.xlu0 %741
        %vm743 = vcmp.lt.s32.totalorder %v390, 125
        %v744 = vsel %vm743, %v740, %v742
        %v745 = vsel %vm743, %v742, %v740
        %s746 = scalar_lea.vmem %s6, 6
        %v747 = vld [vmem:[%s746] ss:$8 sm:$0x3]
        %v749 = vperm.slane %v747, 0
        %v750 = vperm.slane %v747, 1
        %v753 = vmul.f32 %v744, %v749
        %v754 = vmul.f32 %v745, %v750
        %v755 = vld [vmem:[%s5] sm:$0x3]
        %757 = vset.pattern.permute.xlu0 0
        %758 = vperm.xlu0 %757, %v755
        %v759 = vpop.permute.xlu0 %758
        %v761 = vmul.f32 %v639, %v759
        %v762 = vmul.f32 %v640, %v759
        %763 = vset.pattern.permute.xlu0 1
        %764 = vperm.xlu0 %763, %v755
        %v765 = vpop.permute.xlu0 %764
        %v767 = vmul.f32 %v660, %v765
        %v768 = vmul.f32 %v661, %v765
        %769 = vset.pattern.permute.xlu0 2
        %770 = vperm.xlu0 %769, %v755
        %v771 = vpop.permute.xlu0 %770
        %v773 = vmul.f32 %v681, %v771
        %v774 = vmul.f32 %v682, %v771
        %775 = vset.pattern.permute.xlu0 3
        %776 = vperm.xlu0 %775, %v755
        %v777 = vpop.permute.xlu0 %776
        %v779 = vunpack.c.l.s4 269488144
        %v780 = vunpack.c.0.s8 %v779
        %v781 = vperm.slane %v777, %v780
        %v783 = vmul.f32 %v691, %v781
        %784 = vset.pattern.permute.xlu0 4
        %785 = vperm.xlu0 %784, %v755
        %v786 = vpop.permute.xlu0 %785
        %v788 = vmul.f32 %v711, %v786
        %v789 = vmul.f32 %v712, %v786
        %790 = vset.pattern.permute.xlu0 5
        %791 = vperm.xlu0 %790, %v755
        %v792 = vpop.permute.xlu0 %791
        %v794 = vmul.f32 %v732, %v792
        %v795 = vmul.f32 %v733, %v792
        %796 = vset.pattern.permute.xlu0 6
        %797 = vperm.xlu0 %796, %v755
        %v798 = vpop.permute.xlu0 %797
        %v800 = vmul.f32 %v753, %v798
        %v801 = vmul.f32 %v754, %v798
        %v802 = vadd.f32 %v761, %v767
        %v803 = vadd.f32 %v762, %v768
        %805 = vst [vmem:[#allocation1] ss:$4 sm:$0xff] %v783
        %v806 = vld.sshfl [vmem:[#allocation1] sm:$0xff pattern:$0x73625140]
        %v807 = vld.sshfl [vmem:[#allocation1 + $0x8] sm:$0xff pattern:$0x73625140]
        %v810 = vadd.f32 %v773, %v806
        %v811 = vadd.f32 %v774, %v807
        %v812 = vadd.f32 %v788, %v794
        %v813 = vadd.f32 %v789, %v795
        %v814 = vadd.f32 %v802, %v810
        %v815 = vadd.f32 %v803, %v811
        %v816 = vadd.f32 %v812, %v800
        %v817 = vadd.f32 %v813, %v801
        %v818 = vadd.f32 %v814, %v816
        %v819 = vadd.f32 %v815, %v817
        %820 = vrot.lane.b32.xlu0 %v818, 48
        %v821 = vpop.permute.xlu0 %820
        %822 = vrot.lane.b32.xlu0 %v819, 48
        %v823 = vpop.permute.xlu0 %822
        %vm824 = vcmp.lt.s32.totalorder %v390, 48
        %v825 = vsel %vm824, %v821, %v823
        %v826 = vsel %vm824, %v823, %v821
        %s827 = scalar_lea.vmem %s6, 7
        %v828 = vld [vmem:[%s827] ss:$8 sm:$0x3]
        %v830 = vperm.slane %v828, 0
        %v831 = vperm.slane %v828, 1
        %v834 = vmul.f32 %v826, %v830
        %v835 = vmul.f32 %v825, %v831
        %v836 = vld [vmem:[%s5] sm:$0x3]
        %838 = vset.pattern.permute.xlu0 7
        %839 = vperm.xlu0 %838, %v836
        %v840 = vpop.permute.xlu0 %839
        %v842 = vmul.f32 %v639, %v840
        %v843 = vmul.f32 %v640, %v840
        %844 = vset.pattern.permute.xlu0 8
        %845 = vperm.xlu0 %844, %v836
        %v846 = vpop.permute.xlu0 %845
        %v848 = vmul.f32 %v660, %v846
        %v849 = vmul.f32 %v661, %v846
        %850 = vset.pattern.permute.xlu0 9
        %851 = vperm.xlu0 %850, %v836
        %v852 = vpop.permute.xlu0 %851
        %v854 = vmul.f32 %v681, %v852
        %v855 = vmul.f32 %v682, %v852
        %856 = vset.pattern.permute.xlu0 10
        %857 = vperm.xlu0 %856, %v836
        %v858 = vpop.permute.xlu0 %857
        %v860 = vunpack.c.l.s4 269488144
        %v861 = vunpack.c.0.s8 %v860
        %v862 = vperm.slane %v858, %v861
        %v864 = vmul.f32 %v691, %v862
        %865 = vset.pattern.permute.xlu0 11
        %866 = vperm.xlu0 %865, %v836
        %v867 = vpop.permute.xlu0 %866
        %v869 = vmul.f32 %v711, %v867
        %v870 = vmul.f32 %v712, %v867
        %871 = vset.pattern.permute.xlu0 12
        %872 = vperm.xlu0 %871, %v836
        %v873 = vpop.permute.xlu0 %872
        %v875 = vmul.f32 %v732, %v873
        %v876 = vmul.f32 %v733, %v873
        %877 = vset.pattern.permute.xlu0 13
        %878 = vperm.xlu0 %877, %v836
        %v879 = vpop.permute.xlu0 %878
        %v881 = vmul.f32 %v753, %v879
        %v882 = vmul.f32 %v754, %v879
        %v883 = vadd.f32 %v842, %v848
        %v884 = vadd.f32 %v843, %v849
        %886 = vst [vmem:[#allocation1] ss:$4 sm:$0xff] %v864
        %v887 = vld.sshfl [vmem:[#allocation1] sm:$0xff pattern:$0x73625140]
        %v888 = vld.sshfl [vmem:[#allocation1 + $0x8] sm:$0xff pattern:$0x73625140]
        %v891 = vadd.f32 %v854, %v887
        %v892 = vadd.f32 %v855, %v888
        %v893 = vadd.f32 %v869, %v875
        %v894 = vadd.f32 %v870, %v876
        %v895 = vadd.f32 %v883, %v891
        %v896 = vadd.f32 %v884, %v892
        %v897 = vadd.f32 %v893, %v881
        %v898 = vadd.f32 %v894, %v882
        %v899 = vadd.f32 %v895, %v897
        %v900 = vadd.f32 %v896, %v898
        %901 = vrot.lane.b32.xlu0 %v899, 32
        %v902 = vpop.permute.xlu0 %901
        %903 = vrot.lane.b32.xlu0 %v900, 32
        %v904 = vpop.permute.xlu0 %903
        %vm905 = vcmp.lt.s32.totalorder %v390, 32
        %v906 = vsel %vm905, %v902, %v904
        %v907 = vsel %vm905, %v904, %v902
        %s908 = scalar_lea.vmem %s6, 16
        %v909 = vld [vmem:[%s908] ss:$8 sm:$0x3]
        %v911 = vperm.slane %v909, 0
        %v912 = vperm.slane %v909, 1
        %v915 = vmul.f32 %v907, %v911
        %v916 = vmul.f32 %v906, %v912
        %v917 = vld [vmem:[%s5] sm:$0x3]
        %919 = vset.pattern.permute.xlu0 14
        %920 = vperm.xlu0 %919, %v917
        %v921 = vpop.permute.xlu0 %920
        %v923 = vmul.f32 %v639, %v921
        %v924 = vmul.f32 %v640, %v921
        %925 = vset.pattern.permute.xlu0 15
        %926 = vperm.xlu0 %925, %v917
        %v927 = vpop.permute.xlu0 %926
        %v929 = vmul.f32 %v660, %v927
        %v930 = vmul.f32 %v661, %v927
        %931 = vset.pattern.permute.xlu0 16
        %932 = vperm.xlu0 %931, %v917
        %v933 = vpop.permute.xlu0 %932
        %v935 = vmul.f32 %v681, %v933
        %v936 = vmul.f32 %v682, %v933
        %937 = vset.pattern.permute.xlu0 17
        %938 = vperm.xlu0 %937, %v917
        %v939 = vpop.permute.xlu0 %938
        %v941 = vunpack.c.l.s4 269488144
        %v942 = vunpack.c.0.s8 %v941
        %v943 = vperm.slane %v939, %v942
        %v945 = vmul.f32 %v691, %v943
        %946 = vset.pattern.permute.xlu0 18
        %947 = vperm.xlu0 %946, %v917
        %v948 = vpop.permute.xlu0 %947
        %v950 = vmul.f32 %v711, %v948
        %v951 = vmul.f32 %v712, %v948
        %952 = vset.pattern.permute.xlu0 19
        %953 = vperm.xlu0 %952, %v917
        %v954 = vpop.permute.xlu0 %953
        %v956 = vmul.f32 %v732, %v954
        %v957 = vmul.f32 %v733, %v954
        %958 = vset.pattern.permute.xlu0 20
        %959 = vperm.xlu0 %958, %v917
        %v960 = vpop.permute.xlu0 %959
        %v962 = vmul.f32 %v753, %v960
        %v963 = vmul.f32 %v754, %v960
        %v964 = vadd.f32 %v923, %v929
        %v965 = vadd.f32 %v924, %v930
        %967 = vst [vmem:[#allocation1] ss:$4 sm:$0xff] %v945
        %v968 = vld.sshfl [vmem:[#allocation1] sm:$0xff pattern:$0x73625140]
        %v969 = vld.sshfl [vmem:[#allocation1 + $0x8] sm:$0xff pattern:$0x73625140]
        %v972 = vadd.f32 %v935, %v968
        %v973 = vadd.f32 %v936, %v969
        %v974 = vadd.f32 %v950, %v956
        %v975 = vadd.f32 %v951, %v957
        %v976 = vadd.f32 %v964, %v972
        %v977 = vadd.f32 %v965, %v973
        %v978 = vadd.f32 %v974, %v962
        %v979 = vadd.f32 %v975, %v963
        %v980 = vadd.f32 %v976, %v978
        %v981 = vadd.f32 %v977, %v979
        %982 = vrot.lane.b32.xlu0 %v980, 16
        %v983 = vpop.permute.xlu0 %982
        %984 = vrot.lane.b32.xlu0 %v981, 16
        %v985 = vpop.permute.xlu0 %984
        %vm986 = vcmp.lt.s32.totalorder %v390, 16
        %v987 = vsel %vm986, %v983, %v985
        %v988 = vsel %vm986, %v985, %v983
        %s989 = scalar_lea.vmem %s6, 17
        %v990 = vld [vmem:[%s989] ss:$8 sm:$0x3]
        %v992 = vperm.slane %v990, 0
        %v993 = vperm.slane %v990, 1
        %v996 = vmul.f32 %v988, %v992
        %v997 = vmul.f32 %v987, %v993
        %v998 = vld [vmem:[%s5] sm:$0x3]
        %1000 = vset.pattern.permute.xlu0 21
        %1001 = vperm.xlu0 %1000, %v998
        %v1002 = vpop.permute.xlu0 %1001
        %v1004 = vmul.f32 %v639, %v1002
        %v1005 = vmul.f32 %v640, %v1002
        %1006 = vset.pattern.permute.xlu0 22
        %1007 = vperm.xlu0 %1006, %v998
        %v1008 = vpop.permute.xlu0 %1007
        %v1010 = vmul.f32 %v660, %v1008
        %v1011 = vmul.f32 %v661, %v1008
        %1012 = vset.pattern.permute.xlu0 23
        %1013 = vperm.xlu0 %1012, %v998
        %v1014 = vpop.permute.xlu0 %1013
        %v1016 = vmul.f32 %v681, %v1014
        %v1017 = vmul.f32 %v682, %v1014
        %1018 = vset.pattern.permute.xlu0 24
        %1019 = vperm.xlu0 %1018, %v998
        %v1020 = vpop.permute.xlu0 %1019
        %v1022 = vunpack.c.l.s4 269488144
        %v1023 = vunpack.c.0.s8 %v1022
        %v1024 = vperm.slane %v1020, %v1023
        %v1026 = vmul.f32 %v691, %v1024
        %1027 = vset.pattern.permute.xlu0 25
        %1028 = vperm.xlu0 %1027, %v998
        %v1029 = vpop.permute.xlu0 %1028
        %v1031 = vmul.f32 %v711, %v1029
        %v1032 = vmul.f32 %v712, %v1029
        %1033 = vset.pattern.permute.xlu0 26
        %1034 = vperm.xlu0 %1033, %v998
        %v1035 = vpop.permute.xlu0 %1034
        %v1037 = vmul.f32 %v732, %v1035
        %v1038 = vmul.f32 %v733, %v1035
        %1039 = vset.pattern.permute.xlu0 27
        %1040 = vperm.xlu0 %1039, %v998
        %v1041 = vpop.permute.xlu0 %1040
        %v1043 = vmul.f32 %v753, %v1041
        %v1044 = vmul.f32 %v754, %v1041
        %v1045 = vadd.f32 %v1004, %v1010
        %v1046 = vadd.f32 %v1005, %v1011
        %1048 = vst [vmem:[#allocation1] ss:$4 sm:$0xff] %v1026
        %v1049 = vld.sshfl [vmem:[#allocation1] sm:$0xff pattern:$0x73625140]
        %v1050 = vld.sshfl [vmem:[#allocation1 + $0x8] sm:$0xff pattern:$0x73625140]
        %v1053 = vadd.f32 %v1016, %v1049
        %v1054 = vadd.f32 %v1017, %v1050
        %v1055 = vadd.f32 %v1031, %v1037
        %v1056 = vadd.f32 %v1032, %v1038
        %v1057 = vadd.f32 %v1045, %v1053
        %v1058 = vadd.f32 %v1046, %v1054
        %v1059 = vadd.f32 %v1055, %v1043
        %v1060 = vadd.f32 %v1056, %v1044
        %v1061 = vadd.f32 %v1057, %v1059
        %v1062 = vadd.f32 %v1058, %v1060
        %s1063 = scalar_lea.vmem %s6, 18
        %v1064 = vld [vmem:[%s1063] ss:$8 sm:$0x3]
        %v1066 = vperm.slane %v1064, 0
        %v1067 = vperm.slane %v1064, 1
        %v1070 = vmul.f32 %v1061, %v1066
        %v1071 = vmul.f32 %v1062, %v1067
        %v1072 = vld [vmem:[%s5] sm:$0x3]
        %1074 = vset.pattern.permute.xlu0 28
        %1075 = vperm.xlu0 %1074, %v1072
        %v1076 = vpop.permute.xlu0 %1075
        %v1078 = vmul.f32 %v639, %v1076
        %v1079 = vmul.f32 %v640, %v1076
        %1080 = vset.pattern.permute.xlu0 29
        %1081 = vperm.xlu0 %1080, %v1072
        %v1082 = vpop.permute.xlu0 %1081
        %v1084 = vmul.f32 %v660, %v1082
        %v1085 = vmul.f32 %v661, %v1082
        %1086 = vset.pattern.permute.xlu0 30
        %1087 = vperm.xlu0 %1086, %v1072
        %v1088 = vpop.permute.xlu0 %1087
        %v1090 = vmul.f32 %v681, %v1088
        %v1091 = vmul.f32 %v682, %v1088
        %1092 = vset.pattern.permute.xlu0 31
        %1093 = vperm.xlu0 %1092, %v1072
        %v1094 = vpop.permute.xlu0 %1093
        %v1096 = vunpack.c.l.s4 269488144
        %v1097 = vunpack.c.0.s8 %v1096
        %v1098 = vperm.slane %v1094, %v1097
        %v1100 = vmul.f32 %v691, %v1098
        %1101 = vset.pattern.permute.xlu0 32
        %1102 = vperm.xlu0 %1101, %v1072
        %v1103 = vpop.permute.xlu0 %1102
        %v1105 = vmul.f32 %v711, %v1103
        %v1106 = vmul.f32 %v712, %v1103
        %1107 = vset.pattern.permute.xlu0 33
        %1108 = vperm.xlu0 %1107, %v1072
        %v1109 = vpop.permute.xlu0 %1108
        %v1111 = vmul.f32 %v732, %v1109
        %v1112 = vmul.f32 %v733, %v1109
        %1113 = vset.pattern.permute.xlu0 34
        %1114 = vperm.xlu0 %1113, %v1072
        %v1115 = vpop.permute.xlu0 %1114
        %v1117 = vmul.f32 %v753, %v1115
        %v1118 = vmul.f32 %v754, %v1115
        %v1119 = vadd.f32 %v1078, %v1084
        %v1120 = vadd.f32 %v1079, %v1085
        %1122 = vst [vmem:[#allocation1] ss:$4 sm:$0xff] %v1100
        %v1123 = vld.sshfl [vmem:[#allocation1] sm:$0xff pattern:$0x73625140]
        %v1124 = vld.sshfl [vmem:[#allocation1 + $0x8] sm:$0xff pattern:$0x73625140]
        %v1127 = vadd.f32 %v1090, %v1123
        %v1128 = vadd.f32 %v1091, %v1124
        %v1129 = vadd.f32 %v1105, %v1111
        %v1130 = vadd.f32 %v1106, %v1112
        %v1131 = vadd.f32 %v1119, %v1127
        %v1132 = vadd.f32 %v1120, %v1128
        %v1133 = vadd.f32 %v1129, %v1117
        %v1134 = vadd.f32 %v1130, %v1118
        %v1135 = vadd.f32 %v1131, %v1133
        %v1136 = vadd.f32 %v1132, %v1134
        %1137 = vrot.lane.b32.xlu0 %v1135, 112
        %v1138 = vpop.permute.xlu0 %1137
        %1139 = vrot.lane.b32.xlu0 %v1136, 112
        %v1140 = vpop.permute.xlu0 %1139
        %vm1141 = vcmp.lt.s32.totalorder %v390, 112
        %v1142 = vsel %vm1141, %v1138, %v1140
        %v1143 = vsel %vm1141, %v1140, %v1138
        %s1144 = scalar_lea.vmem %s6, 19
        %v1145 = vld [vmem:[%s1144] ss:$8 sm:$0x3]
        %v1147 = vperm.slane %v1145, 0
        %v1148 = vperm.slane %v1145, 1
        %v1151 = vmul.f32 %v1142, %v1147
        %v1152 = vmul.f32 %v1143, %v1148
        %v1153 = vld [vmem:[%s5] sm:$0x3]
        %1155 = vset.pattern.permute.xlu0 35
        %1156 = vperm.xlu0 %1155, %v1153
        %v1157 = vpop.permute.xlu0 %1156
        %v1159 = vmul.f32 %v639, %v1157
        %v1160 = vmul.f32 %v640, %v1157
        %1161 = vset.pattern.permute.xlu0 36
        %1162 = vperm.xlu0 %1161, %v1153
        %v1163 = vpop.permute.xlu0 %1162
        %v1165 = vmul.f32 %v660, %v1163
        %v1166 = vmul.f32 %v661, %v1163
        %1167 = vset.pattern.permute.xlu0 37
        %1168 = vperm.xlu0 %1167, %v1153
        %v1169 = vpop.permute.xlu0 %1168
        %v1171 = vmul.f32 %v681, %v1169
        %v1172 = vmul.f32 %v682, %v1169
        %1173 = vset.pattern.permute.xlu0 38
        %1174 = vperm.xlu0 %1173, %v1153
        %v1175 = vpop.permute.xlu0 %1174
        %v1177 = vunpack.c.l.s4 269488144
        %v1178 = vunpack.c.0.s8 %v1177
        %v1179 = vperm.slane %v1175, %v1178
        %v1181 = vmul.f32 %v691, %v1179
        %1182 = vset.pattern.permute.xlu0 39
        %1183 = vperm.xlu0 %1182, %v1153
        %v1184 = vpop.permute.xlu0 %1183
        %v1186 = vmul.f32 %v711, %v1184
        %v1187 = vmul.f32 %v712, %v1184
        %1188 = vset.pattern.permute.xlu0 40
        %1189 = vperm.xlu0 %1188, %v1153
        %v1190 = vpop.permute.xlu0 %1189
        %v1192 = vmul.f32 %v732, %v1190
        %v1193 = vmul.f32 %v733, %v1190
        %1194 = vset.pattern.permute.xlu0 41
        %1195 = vperm.xlu0 %1194, %v1153
        %v1196 = vpop.permute.xlu0 %1195
        %v1198 = vmul.f32 %v753, %v1196
        %v1199 = vmul.f32 %v754, %v1196
        %v1200 = vadd.f32 %v1159, %v1165
        %v1201 = vadd.f32 %v1160, %v1166
        %1203 = vst [vmem:[#allocation1] ss:$4 sm:$0xff] %v1181
        %v1204 = vld.sshfl [vmem:[#allocation1] sm:$0xff pattern:$0x73625140]
        %v1205 = vld.sshfl [vmem:[#allocation1 + $0x8] sm:$0xff pattern:$0x73625140]
        %v1208 = vadd.f32 %v1171, %v1204
        %v1209 = vadd.f32 %v1172, %v1205
        %v1210 = vadd.f32 %v1186, %v1192
        %v1211 = vadd.f32 %v1187, %v1193
        %v1212 = vadd.f32 %v1200, %v1208
        %v1213 = vadd.f32 %v1201, %v1209
        %v1214 = vadd.f32 %v1210, %v1198
        %v1215 = vadd.f32 %v1211, %v1199
        %v1216 = vadd.f32 %v1212, %v1214
        %v1217 = vadd.f32 %v1213, %v1215
        %1218 = vrot.lane.b32.xlu0 %v1216, 96
        %v1219 = vpop.permute.xlu0 %1218
        %1220 = vrot.lane.b32.xlu0 %v1217, 96
        %v1221 = vpop.permute.xlu0 %1220
        %vm1222 = vcmp.lt.s32.totalorder %v390, 96
        %v1223 = vsel %vm1222, %v1219, %v1221
        %v1224 = vsel %vm1222, %v1221, %v1219
        %s1225 = scalar_lea.vmem %s6, 20
        %v1226 = vld [vmem:[%s1225] ss:$8 sm:$0x3]
        %v1228 = vperm.slane %v1226, 0
        %v1229 = vperm.slane %v1226, 1
        %v1232 = vmul.f32 %v1223, %v1228
        %v1233 = vmul.f32 %v1224, %v1229
        %v1234 = vld [vmem:[%s5] sm:$0x3]
        %1236 = vset.pattern.permute.xlu0 42
        %1237 = vperm.xlu0 %1236, %v1234
        %v1238 = vpop.permute.xlu0 %1237
        %v1240 = vmul.f32 %v639, %v1238
        %v1241 = vmul.f32 %v640, %v1238
        %1242 = vset.pattern.permute.xlu0 43
        %1243 = vperm.xlu0 %1242, %v1234
        %v1244 = vpop.permute.xlu0 %1243
        %v1246 = vmul.f32 %v660, %v1244
        %v1247 = vmul.f32 %v661, %v1244
        %1248 = vset.pattern.permute.xlu0 44
        %1249 = vperm.xlu0 %1248, %v1234
        %v1250 = vpop.permute.xlu0 %1249
        %v1252 = vmul.f32 %v681, %v1250
        %v1253 = vmul.f32 %v682, %v1250
        %1254 = vset.pattern.permute.xlu0 45
        %1255 = vperm.xlu0 %1254, %v1234
        %v1256 = vpop.permute.xlu0 %1255
        %v1258 = vunpack.c.l.s4 269488144
        %v1259 = vunpack.c.0.s8 %v1258
        %v1260 = vperm.slane %v1256, %v1259
        %v1262 = vmul.f32 %v691, %v1260
        %1263 = vset.pattern.permute.xlu0 46
        %1264 = vperm.xlu0 %1263, %v1234
        %v1265 = vpop.permute.xlu0 %1264
        %v1267 = vmul.f32 %v711, %v1265
        %v1268 = vmul.f32 %v712, %v1265
        %1269 = vset.pattern.permute.xlu0 47
        %1270 = vperm.xlu0 %1269, %v1234
        %v1271 = vpop.permute.xlu0 %1270
        %v1273 = vmul.f32 %v732, %v1271
        %v1274 = vmul.f32 %v733, %v1271
        %1275 = vset.pattern.permute.xlu0 48
        %1276 = vperm.xlu0 %1275, %v1234
        %v1277 = vpop.permute.xlu0 %1276
        %v1279 = vmul.f32 %v753, %v1277
        %v1280 = vmul.f32 %v754, %v1277
        %v1281 = vadd.f32 %v1240, %v1246
        %v1282 = vadd.f32 %v1241, %v1247
        %1284 = vst [vmem:[#allocation1] ss:$4 sm:$0xff] %v1262
        %v1285 = vld.sshfl [vmem:[#allocation1] sm:$0xff pattern:$0x73625140]
        %v1286 = vld.sshfl [vmem:[#allocation1 + $0x8] sm:$0xff pattern:$0x73625140]
        %v1289 = vadd.f32 %v1252, %v1285
        %v1290 = vadd.f32 %v1253, %v1286
        %v1291 = vadd.f32 %v1267, %v1273
        %v1292 = vadd.f32 %v1268, %v1274
        %v1293 = vadd.f32 %v1281, %v1289
        %v1294 = vadd.f32 %v1282, %v1290
        %v1295 = vadd.f32 %v1291, %v1279
        %v1296 = vadd.f32 %v1292, %v1280
        %v1297 = vadd.f32 %v1293, %v1295
        %v1298 = vadd.f32 %v1294, %v1296
        %1299 = vrot.lane.b32.xlu0 %v1297, 80
        %v1300 = vpop.permute.xlu0 %1299
        %1301 = vrot.lane.b32.xlu0 %v1298, 80
        %v1302 = vpop.permute.xlu0 %1301
        %vm1303 = vcmp.lt.s32.totalorder %v390, 80
        %v1304 = vsel %vm1303, %v1300, %v1302
        %v1305 = vsel %vm1303, %v1302, %v1300
        %s1306 = scalar_lea.vmem %s6, 21
        %v1307 = vld [vmem:[%s1306] ss:$8 sm:$0x3]
        %v1309 = vperm.slane %v1307, 0
        %v1310 = vperm.slane %v1307, 1
        %v1313 = vmul.f32 %v1304, %v1309
        %v1314 = vmul.f32 %v1305, %v1310
        %v1315 = vadd.f32 %v834, %v915
        %v1316 = vadd.f32 %v835, %v916
        %v1317 = vadd.f32 %v996, %v1070
        %v1318 = vadd.f32 %v997, %v1071
        %v1319 = vadd.f32 %v1151, %v1232
        %v1320 = vadd.f32 %v1152, %v1233
        %v1321 = vadd.f32 %v1315, %v1317
        %v1322 = vadd.f32 %v1316, %v1318
        %v1323 = vadd.f32 %v1319, %v1313
        %v1324 = vadd.f32 %v1320, %v1314
        %v1325 = vadd.f32 %v1321, %v1323
        %v1326 = vadd.f32 %v1322, %v1324
        %v1329 = vrot.slane %v1326, 6
        %v1330 = vsel %vm461, %v1325, %v1329
        %1332 = vst [vmem:[#allocation3] sm:$0xf] %v1330
        %v1333 = vld [vmem:[#allocation3] ss:$2 sm:$0x3]
        %s1334 = scalar_lea.vmem [#allocation3], 1
        %v1335 = vld [vmem:[%s1334] ss:$2 sm:$0x3]
        %v1336 = vadd.f32 %v1333, %v1335
        %s1337 = sld [smem:[#allocation4]]
        %v1338 = vstv %s1337
        %v1339 = vadd.f32 %v1336, %v1338
        %v1340 = vxor.u32 %v1339, 2147483648
        %v1341 = vmul.f32 %v1340, 1.442695
        %v1342 = vpow.pop %v1341
        %v1343 = vadd.f32 %v1342, 1.0
        %v1344 = vrcp.pop %v1343
        %v1345 = vmul.f32 %v1343, %v1344
        %v1346 = vsub.f32 1.0, %v1345
        %v1347 = vmul.f32 %v1344, %v1346
        %v1348 = vadd.f32 %v1344, %v1347
        %vm1349 = vweird.f32 %v1343
        %vm1350 = vweird.f32 %v1344
        %vm1351 = vmor %vm1349, %vm1350
        %v1352 = vsel %vm1351, %v1344, %v1348
        %v1353 = vand.u32 2147483647, %v1343
        %vm1354 = vcmp.eq.f32.partialorder %v1353, 8.507059e+37
        %v1355 = vand.u32 %v1343, 2147483648
        %v1356 = vor.u32 1.1754944e-38, %v1355
        %v1357 = vsel %vm1354, %v1356, %v1352
        %v1358 = vmul.f32 1.0, %v1357
        %v1359 = vld [vmem:[%s341] sm:$0xff]
        %v1360 = vld [vmem:[%s341 + $0x8] sm:$0xff]
        %v1361 = vld [vmem:[%s341 + $0x10] sm:$0xff]
        %v1362 = vld [vmem:[%s341 + $0x18] sm:$0xff]
        %v1363 = vld [vmem:[%s341 + $0x20] sm:$0xff]
        %v1364 = vld [vmem:[%s341 + $0x28] sm:$0xff]
        %v1365 = vld [vmem:[%s341 + $0x30] sm:$0xff]
        %v1366 = vld [vmem:[%s341 + $0x38] sm:$0xff]
        %v1368 = vperm.slane %v1358, 0
        %v1369 = vperm.slane %v1358, 1
        %v1372 = vmul.f32 %v1359, %v1368
        %v1373 = vmul.f32 %v1360, %v1369
        %v1374 = vmul.f32 %v1361, %v1368
        %v1375 = vmul.f32 %v1362, %v1369
        %v1376 = vmul.f32 %v1363, %v1368
        %v1377 = vmul.f32 %v1364, %v1369
        %v1378 = vmul.f32 %v1365, %v1368
        %v1379 = vmul.f32 %v1366, %v1369
        %1380 = vst [vmem:[%s341] sm:$0xff] %v1372
        %1381 = vst [vmem:[%s341 + $0x8] sm:$0xff] %v1373
        %1382 = vst [vmem:[%s341 + $0x10] sm:$0xff] %v1374
        %1383 = vst [vmem:[%s341 + $0x18] sm:$0xff] %v1375
        %1384 = vst [vmem:[%s341 + $0x20] sm:$0xff] %v1376
        %1385 = vst [vmem:[%s341 + $0x28] sm:$0xff] %v1377
        %1386 = vst [vmem:[%s341 + $0x30] sm:$0xff] %v1378
        %1387 = vst [vmem:[%s341 + $0x38] sm:$0xff] %v1379
        %s1388 = sand.u32 %s208, 1
        %s1389 = scalar_lea.sflag [#allocation7], %s1388
        %s1390 = sand.u32 %s208, 1
        %s1391 = smul.addr %s1390, 64
        %s1392 = scalar_lea.vmem [#allocation10], %s1391
        // Predicated region
        $region61: #{tpu_custom_call.1} parent=51 // pred_check
          %p1393 = pneg %p218
        $region62: #{tpu_custom_call.1} parent=51 // pred_check_branch
          %1395 = sbr.rel (%p1393) target = $region64
        $region63: #{tpu_custom_call.1} parent=51 // pred_region
          %1397 = vsyncadd %s1389, 0
          %s1398 = smul.addr %s27, 8
          %s1399 = smul.addr %s1398, 8
          %s1400 = scalar_lea.hbm %s8, %s1399
          %s1401 = sshll.u32 %s1392, 4
          %s1402 = int_to_ptr.vmem [resolvable:$true] %s1401
          %s1403 = sshll.u32 %s1400, 4
          %s1404 = int_to_ptr.hbm [resolvable:$true] %s1403
          %1409 = dma.vmem_to_hbm [thread:$0]  %s1402, 1024, %s1404, %s1389, 256, 256, 16
        $region64: #{tpu_custom_call.1} parent=51 // pred_fallthru
          _
      $region52: #{tpu_custom_call.1} parent=5 // pred_fallthru
        _
      %p1410 = scmp.le.s32.totalorder 2, %s22
      // Predicated region
      $region65: #{tpu_custom_call.1} parent=5 // pred_check
        %p1411 = pneg %p1410
      $region66: #{tpu_custom_call.1} parent=5 // pred_check_branch
        %1413 = sbr.rel (%p1411) target = $region68
      $region67: #{tpu_custom_call.1} parent=5 // pred_region
        %s1414 = ssub.s32 %s22, 2
        // Predicated region
        $region69: #{tpu_custom_call.1} parent=67 // pred_check
          %p1415 = pneg %p224
        $region70: #{tpu_custom_call.1} parent=67 // pred_check_branch
          %1417 = sbr.rel (%p1415) target = $region72
        $region71: #{tpu_custom_call.1} parent=67 // pred_region
          %s1418 = sand.u32 %s209, 1
          %s1419 = scalar_lea.sflag [#allocation7], %s1418
          %s1420 = sand.u32 %s209, 1
          %s1421 = smul.addr %s1420, 64
          %s1422 = scalar_lea.vmem [#allocation10], %s1421
          %1424 = dma.done %s1419, 1024
        $region72: #{tpu_custom_call.1} parent=67 // pred_fallthru
          _
      $region68: #{tpu_custom_call.1} parent=5 // pred_fallthru
        _
    $region6: #{tpu_custom_call.1} parent=1 // loop_footer
      %s26 = sadd.s32 1, %s22
    $region7: #{tpu_custom_call.1} parent=1 // loop_footer_branch
      %21 = sbr.rel target = $region3
    $region8: #{tpu_custom_call.1} parent=1 // loop_exit
      _
    %1425 = vsyncpa [#allocation6], 1
    %s1426 = scalar_lea.sflag [#allocation6], 1
    %1427 = vsyncpa %s1426, 1
    %1428 = vsyncpa [#allocation9], 1
    %1429 = vsyncpa [#allocation7], 1
    %s1430 = scalar_lea.sflag [#allocation7], 1
    %1431 = vsyncpa %s1430, 1

</llo_original>
